<compile_context>
chip_gen: v7x
topology: tpu7x:2x2x1
jax: 0.10.0
libtpu: 0.0.40
codegen_flags: <defaults>
</compile_context>

<pallas_src>
import jax
import jax.numpy as jnp
from jax.experimental import pallas as pl
from jax.experimental.pallas import tpu as pltpu  # noqa: F401  (TPU backend)

# ---------------------------------------------------------------------------
# Synthetic "protein_list" (original came from a CSV; no file reads allowed).
# ---------------------------------------------------------------------------
PROTEIN_LIST = ["P00001", "P00002", "P00003", "P00004"]
P = len(PROTEIN_LIST)

# Model dimensions (hidden sizes fixed by the module; D_in / batch kept small).
D_IN = 128       # X.shape[1] — chosen lane-aligned for the example
H1 = 1000        # logical fc1 width (as in the PyTorch module)
H1_PAD = 1024    # padded width for clean (8,128) tiling
H2 = 256
H3 = 64
OUT_PAD = 128    # lane-dense packed-head output width (>= P)
BATCH = 8


# ---------------------------------------------------------------------------
# Single fused kernel:
#   h1  = relu(x  @ W1 + b1)      (B, 1024)
#   h2  = relu(h1 @ W2 + b2)      (B, 256)
#   h3  = relu(h2 @ W3p + b3p)    (B, P*64)   -- all heads' hidden, packed
#   out =       h3 @ W4bd + b4p   (B, 128)    -- block-diagonal W4, lane-dense
# Weights are bf16; activations / bias math in f32; matmuls accumulate in f32.
# ---------------------------------------------------------------------------
def fused_net_kernel(x_ref, w1_ref, b1_ref, w2_ref, b2_ref,
                     w3_ref, b3_ref, w4_ref, b4_ref, out_ref):
    x = x_ref[...]                                              # f32 (B, D_IN)

    h1 = jnp.dot(x.astype(jnp.bfloat16), w1_ref[...],
                 preferred_element_type=jnp.float32)
    h1 = jnp.maximum(h1 + b1_ref[...], 0.0)                     # (B, H1_PAD)

    h2 = jnp.dot(h1.astype(jnp.bfloat16), w2_ref[...],
                 preferred_element_type=jnp.float32)
    h2 = jnp.maximum(h2 + b2_ref[...], 0.0)                     # (B, H2)

    h3 = jnp.dot(h2.astype(jnp.bfloat16), w3_ref[...],
                 preferred_element_type=jnp.float32)
    h3 = jnp.maximum(h3 + b3_ref[...], 0.0)                     # (B, P*H3)

    out = jnp.dot(h3.astype(jnp.bfloat16), w4_ref[...],
                  preferred_element_type=jnp.float32)
    out_ref[...] = out + b4_ref[...]                            # (B, OUT_PAD)


def net_forward(x, packed):
    B = x.shape[0]
    args = (x,
            packed["w1"], packed["b1"],
            packed["w2"], packed["b2"],
            packed["w3"], packed["b3"],
            packed["w4"], packed["b4"])
    in_specs = [pl.BlockSpec(a.shape, lambda: (0, 0)) for a in args]
    out = pl.pallas_call(
        fused_net_kernel,
        out_shape=jax.ShapeDtypeStruct((B, OUT_PAD), jnp.float32),
        in_specs=in_specs,
        out_specs=pl.BlockSpec((B, OUT_PAD), lambda: (0, 0)),
    )(*args)
    # Lane-dense slab -> per-protein dict of (B, 1) outputs (free plumbing).
    return {p: out[:, i:i + 1] for i, p in enumerate(PROTEIN_LIST)}


# ---------------------------------------------------------------------------
# Parameter init (PyTorch-Linear-style uniform(-1/sqrt(fan_in))), logical
# (unpadded, per-protein) layout — used directly by the pure-JAX reference.
# ---------------------------------------------------------------------------
def init_params(key):
    def uni(k, shape, fan_in):
        bound = 1.0 / jnp.sqrt(jnp.float32(fan_in))
        return jax.random.uniform(k, shape, jnp.float32, -bound, bound)

    ks = jax.random.split(key, 8)
    return {
        # weights pre-transposed to (in, out)
        "w1": uni(ks[0], (D_IN, H1), D_IN),
        "b1": uni(ks[1], (1, H1), D_IN),
        "w2": uni(ks[2], (H1, H2), H1),
        "b2": uni(ks[3], (1, H2), H1),
        # stacked per-protein heads
        "w3": uni(ks[4], (P, H2, H3), H2),
        "b3": uni(ks[5], (P, 1, H3), H2),
        "w4": uni(ks[6], (P, H3, 1), H3),
        "b4": uni(ks[7], (P, 1, 1), H3),
    }


# ---------------------------------------------------------------------------
# Pack params for the fused kernel: pad H1 -> 1024 (zeros), concat heads,
# build block-diagonal W4, cast weights to bf16 (biases stay f32).
# ---------------------------------------------------------------------------
def pack_params(params):
    pad = H1_PAD - H1
    w1 = jnp.pad(params["w1"], ((0, 0), (0, pad)))        # (D_IN, 1024)
    b1 = jnp.pad(params["b1"], ((0, 0), (0, pad)))        # (1, 1024)
    w2 = jnp.pad(params["w2"], ((0, pad), (0, 0)))        # (1024, H2)

    # Heads: concat W3 along output dim, flatten b3 to match.
    w3 = jnp.concatenate([params["w3"][i] for i in range(P)], axis=1)  # (H2, P*H3)
    b3 = params["b3"].reshape(1, P * H3)                               # (1, P*H3)

    # Block-diagonal W4: rows p*H3:(p+1)*H3 feed output column p.
    w4 = jnp.zeros((P * H3, OUT_PAD), jnp.float32)
    for i in range(P):
        w4 = w4.at[i * H3:(i + 1) * H3, i].set(params["w4"][i][:, 0])
    b4 = jnp.zeros((1, OUT_PAD), jnp.float32)
    b4 = b4.at[0, :P].set(params["b4"][:, 0, 0])

    return {
        "w1": w1.astype(jnp.bfloat16), "b1": b1,
        "w2": w2.astype(jnp.bfloat16), "b2": params["b2"],
        "w3": w3.astype(jnp.bfloat16), "b3": b3,
        "w4": w4.astype(jnp.bfloat16), "b4": b4,
    }


# ---------------------------------------------------------------------------
# Pure-JAX reference with the same numerics (bf16 matmul inputs, f32 acc).
# ---------------------------------------------------------------------------
def net_forward_ref(x, params):
    def mm(a, w):
        return jnp.dot(a.astype(jnp.bfloat16), w.astype(jnp.bfloat16),
                       preferred_element_type=jnp.float32)

    h1 = jnp.maximum(mm(x, params["w1"]) + params["b1"], 0.0)
    h2 = jnp.maximum(mm(h1, params["w2"]) + params["b2"], 0.0)
    out = {}
    for i, p in enumerate(PROTEIN_LIST):
        h3 = jnp.maximum(mm(h2, params["w3"][i]) + params["b3"][i], 0.0)
        out[p] = mm(h3, params["w4"][i]) + params["b4"][i]
    return out


if __name__ == "__main__":
    key = jax.random.PRNGKey(0)
    k_x, k_p = jax.random.split(key)
    x = jax.random.normal(k_x, (BATCH, D_IN), jnp.float32)
    params = init_params(k_p)
    packed = pack_params(params)

    fwd = jax.jit(net_forward)
    outputs = jax.block_until_ready(fwd(x, packed))
    ref = net_forward_ref(x, params)

    for p in PROTEIN_LIST:
        assert outputs[p].shape == (BATCH, 1), outputs[p].shape
        assert jnp.allclose(outputs[p], ref[p], atol=1e-3, rtol=1e-3), p

    print("KERNEL_OK")
</pallas_src>

<mosaic_0001>
module attributes {stable_mosaic.version = 11 : i64} {
  func.func @fused_net_kernel(%arg0: memref<8x128xf32, #tpu.memory_space<vmem>>, %arg1: memref<128x1024xbf16, #tpu.memory_space<vmem>>, %arg2: memref<1x1024xf32, #tpu.memory_space<vmem>>, %arg3: memref<1024x256xbf16, #tpu.memory_space<vmem>>, %arg4: memref<1x256xf32, #tpu.memory_space<vmem>>, %arg5: memref<256x256xbf16, #tpu.memory_space<vmem>>, %arg6: memref<1x256xf32, #tpu.memory_space<vmem>>, %arg7: memref<256x128xbf16, #tpu.memory_space<vmem>>, %arg8: memref<1x128xf32, #tpu.memory_space<vmem>>, %arg9: memref<8x128xf32, #tpu.memory_space<vmem>>) attributes {dimension_semantics = [], scalar_prefetch = 0 : i64, scratch_operands = 0 : i64, tpu.core_type = #tpu.core_type<tc>} {
    %c0 = arith.constant 0 : index
    %c0_0 = arith.constant 0 : index
    %0 = vector.load %arg0[%c0, %c0_0] : memref<8x128xf32, #tpu.memory_space<vmem>>, vector<8x128xf32>
    %1 = arith.truncf %0 : vector<8x128xf32> to vector<8x128xbf16>
    %c0_1 = arith.constant 0 : index
    %c0_2 = arith.constant 0 : index
    %2 = vector.load %arg1[%c0_1, %c0_2] : memref<128x1024xbf16, #tpu.memory_space<vmem>>, vector<128x1024xbf16>
    %cst = arith.constant dense<0.000000e+00> : vector<8x1024xf32>
    %3 = tpu.matmul %1, %2, %cst {dimension_numbers = #tpu.dot_dimension_numbers<[1], [0], [0], [1], [0, 0, 1, 1], [], []>} : vector<8x128xbf16>, vector<128x1024xbf16>, vector<8x1024xf32> -> vector<8x1024xf32>
    %c0_3 = arith.constant 0 : index
    %c0_4 = arith.constant 0 : index
    %4 = vector.load %arg2[%c0_3, %c0_4] : memref<1x1024xf32, #tpu.memory_space<vmem>>, vector<1x1024xf32>
    %5 = vector.broadcast %4 : vector<1x1024xf32> to vector<8x1024xf32>
    %6 = arith.addf %3, %5 : vector<8x1024xf32>
    %cst_5 = arith.constant 0.000000e+00 : f32
    %7 = vector.broadcast %cst_5 : f32 to vector<8x1024xf32>
    %8 = arith.maximumf %6, %7 : vector<8x1024xf32>
    %9 = arith.truncf %8 : vector<8x1024xf32> to vector<8x1024xbf16>
    %c0_6 = arith.constant 0 : index
    %c0_7 = arith.constant 0 : index
    %10 = vector.load %arg3[%c0_6, %c0_7] : memref<1024x256xbf16, #tpu.memory_space<vmem>>, vector<1024x256xbf16>
    %cst_8 = arith.constant dense<0.000000e+00> : vector<8x256xf32>
    %11 = tpu.matmul %9, %10, %cst_8 {dimension_numbers = #tpu.dot_dimension_numbers<[1], [0], [0], [1], [0, 0, 1, 1], [], []>} : vector<8x1024xbf16>, vector<1024x256xbf16>, vector<8x256xf32> -> vector<8x256xf32>
    %c0_9 = arith.constant 0 : index
    %c0_10 = arith.constant 0 : index
    %12 = vector.load %arg4[%c0_9, %c0_10] : memref<1x256xf32, #tpu.memory_space<vmem>>, vector<1x256xf32>
    %13 = vector.broadcast %12 : vector<1x256xf32> to vector<8x256xf32>
    %14 = arith.addf %11, %13 : vector<8x256xf32>
    %cst_11 = arith.constant 0.000000e+00 : f32
    %15 = vector.broadcast %cst_11 : f32 to vector<8x256xf32>
    %16 = arith.maximumf %14, %15 : vector<8x256xf32>
    %17 = arith.truncf %16 : vector<8x256xf32> to vector<8x256xbf16>
    %c0_12 = arith.constant 0 : index
    %c0_13 = arith.constant 0 : index
    %18 = vector.load %arg5[%c0_12, %c0_13] : memref<256x256xbf16, #tpu.memory_space<vmem>>, vector<256x256xbf16>
    %cst_14 = arith.constant dense<0.000000e+00> : vector<8x256xf32>
    %19 = tpu.matmul %17, %18, %cst_14 {dimension_numbers = #tpu.dot_dimension_numbers<[1], [0], [0], [1], [0, 0, 1, 1], [], []>} : vector<8x256xbf16>, vector<256x256xbf16>, vector<8x256xf32> -> vector<8x256xf32>
    %c0_15 = arith.constant 0 : index
    %c0_16 = arith.constant 0 : index
    %20 = vector.load %arg6[%c0_15, %c0_16] : memref<1x256xf32, #tpu.memory_space<vmem>>, vector<1x256xf32>
    %21 = vector.broadcast %20 : vector<1x256xf32> to vector<8x256xf32>
    %22 = arith.addf %19, %21 : vector<8x256xf32>
    %cst_17 = arith.constant 0.000000e+00 : f32
    %23 = vector.broadcast %cst_17 : f32 to vector<8x256xf32>
    %24 = arith.maximumf %22, %23 : vector<8x256xf32>
    %25 = arith.truncf %24 : vector<8x256xf32> to vector<8x256xbf16>
    %c0_18 = arith.constant 0 : index
    %c0_19 = arith.constant 0 : index
    %26 = vector.load %arg7[%c0_18, %c0_19] : memref<256x128xbf16, #tpu.memory_space<vmem>>, vector<256x128xbf16>
    %cst_20 = arith.constant dense<0.000000e+00> : vector<8x128xf32>
    %27 = tpu.matmul %25, %26, %cst_20 {dimension_numbers = #tpu.dot_dimension_numbers<[1], [0], [0], [1], [0, 0, 1, 1], [], []>} : vector<8x256xbf16>, vector<256x128xbf16>, vector<8x128xf32> -> vector<8x128xf32>
    %c0_21 = arith.constant 0 : index
    %c0_22 = arith.constant 0 : index
    %28 = vector.load %arg8[%c0_21, %c0_22] : memref<1x128xf32, #tpu.memory_space<vmem>>, vector<1x128xf32>
    %29 = vector.broadcast %28 : vector<1x128xf32> to vector<8x128xf32>
    %30 = arith.addf %27, %29 : vector<8x128xf32>
    %c0_23 = arith.constant 0 : index
    %c0_24 = arith.constant 0 : index
    %31 = vector.load %arg9[%c0_23, %c0_24] : memref<8x128xf32, #tpu.memory_space<vmem>>, vector<8x128xf32>
    tpu.vector_store %arg9[%c0_23, %c0_24], %30 {strides = array<i32>} : memref<8x128xf32, #tpu.memory_space<vmem>>, vector<8x128xf32>,
    return
  }
}

</mosaic_0001>

<llo_original>
// kernel: net_forward.1
$region0: #{net_forward.1}
  #allocation0 [shape = 'u32[]', space=smem, size = 0x4, offset = 0x4, fixed_abs, tag = 'smem constant byte address 0x4 - core index']
  #allocation1 [shape = 'u32[144,128]{1,0:T(1,128)}', space=vmem, size = 0x12000, scoped, tag = 'internal scratch']
  %s0 = inlined_call_operand.hbm [shape: f32[8,128], index: 0, kind: input, shape index: {}]
  %s1 = inlined_call_operand.hbm [shape: bf16[128,1024], index: 1, kind: input, shape index: {}]
  %s2 = inlined_call_operand.hbm [shape: f32[1,1024], index: 2, kind: input, shape index: {}]
  %s3 = inlined_call_operand.hbm [shape: bf16[1024,256], index: 3, kind: input, shape index: {}]
  %s4 = inlined_call_operand.vmem [shape: f32[1,256], index: 4, kind: input, shape index: {}]
  %s5 = inlined_call_operand.hbm [shape: bf16[256,256], index: 5, kind: input, shape index: {}]
  %s6 = inlined_call_operand.vmem [shape: f32[1,256], index: 6, kind: input, shape index: {}]
  %s7 = inlined_call_operand.hbm [shape: bf16[256,128], index: 7, kind: input, shape index: {}]
  %s8 = inlined_call_operand.vmem [shape: f32[1,128], index: 8, kind: input, shape index: {}]
  %s9 = inlined_call_operand.vmem [shape: f32[8,128], index: 9, kind: output, shape index: {}]
  %s10 = sld [smem:[#allocation0]]
  $region70: #{net_forward.1} parent=0
    _
  %s12 = ssub.s32 1, %s10
  %s13 = scalar_select 0, %s12, %s10
  $region1: #{net_forward.1} parent=0
    #allocation2 [shape = 'u8[4096]{0}', space=vmem, size = 0x1000, scoped, tag = 'input window, operand 0, single buffered']
    #allocation3 [shape = 's32[1]{0}', space=sflag, size = 0x4, scoped, tag = 'scoped memory for net_forward.1']
    #allocation4 [shape = 'u8[262144]{0}', space=vmem, size = 0x40000, scoped, tag = 'input window, operand 1, single buffered']
    #allocation5 [shape = 's32[1]{0}', space=sflag, size = 0x4, scoped, tag = 'scoped memory for net_forward.1']
    #allocation6 [shape = 'u8[4096]{0}', space=vmem, size = 0x1000, scoped, tag = 'input window, operand 2, single buffered']
    #allocation7 [shape = 'u8[524288]{0}', space=vmem, size = 0x80000, scoped, tag = 'input window, operand 3, single buffered']
    #allocation8 [shape = 's32[1]{0}', space=sflag, size = 0x4, scoped, tag = 'scoped memory for net_forward.1']
    #allocation9 [shape = 'u8[131072]{0}', space=vmem, size = 0x20000, scoped, tag = 'input window, operand 5, single buffered']
    #allocation10 [shape = 'u8[65536]{0}', space=vmem, size = 0x10000, scoped, tag = 'input window, operand 7, single buffered']
    #allocation11 [shape = 's32[1]{0}', space=sflag, size = 0x4, scoped, tag = 'scoped memory for net_forward.1']
    %14 = vsyncpa [#allocation3], 0
    %15 = vsyncpa [#allocation5], 0
    %16 = vsyncpa [#allocation8], 0
    %17 = vsyncpa [#allocation11], 0
    // Predicated region
    $region2: #{net_forward.1} parent=1 // pred_check
      _
    $region3: #{net_forward.1} parent=1 // pred_check_branch
      %19 = sbr.rel (0) target = $region5
    $region4: #{net_forward.1} parent=1 // pred_region
      %s21 = ssub.s32 128, 128
      %22 = vsyncadd [#allocation3], %s21
      %s24 = sshll.u32 [#allocation2], 4
      %s25 = int_to_ptr.vmem [resolvable:$true] %s24
      %27 = dma.hbm_to_vmem [thread:$0]  %s0, 128, %s25, [#allocation3]
    $region5: #{net_forward.1} parent=1 // pred_fallthru
      _
    // Predicated region
    $region6: #{net_forward.1} parent=1 // pred_check
      _
    $region7: #{net_forward.1} parent=1 // pred_check_branch
      %29 = sbr.rel (0) target = $region9
    $region8: #{net_forward.1} parent=1 // pred_region
      %s31 = ssub.s32 8192, 8192
      %32 = vsyncadd [#allocation5], %s31
      %s33 = sshll.u32 [#allocation4], 4
      %s34 = int_to_ptr.vmem [resolvable:$true] %s33
      %39 = dma.hbm_to_vmem [thread:$0]  %s1, 8192, %s34, [#allocation5], 512, 512, 32
    $region9: #{net_forward.1} parent=1 // pred_fallthru
      _
    // Predicated region
    $region10: #{net_forward.1} parent=1 // pred_check
      _
    $region11: #{net_forward.1} parent=1 // pred_check_branch
      %41 = sbr.rel (0) target = $region13
    $region12: #{net_forward.1} parent=1 // pred_region
      %s43 = ssub.s32 128, 128
      %44 = vsyncadd [#allocation5], %s43
      %s46 = sshll.u32 [#allocation6], 4
      %s47 = int_to_ptr.vmem [resolvable:$true] %s46
      %49 = dma.hbm_to_vmem [thread:$0]  %s2, 128, %s47, [#allocation5]
    $region13: #{net_forward.1} parent=1 // pred_fallthru
      _
    // Predicated region
    $region14: #{net_forward.1} parent=1 // pred_check
      _
    $region15: #{net_forward.1} parent=1 // pred_check_branch
      %51 = sbr.rel (0) target = $region17
    $region16: #{net_forward.1} parent=1 // pred_region
      %s53 = ssub.s32 16384, 16384
      %54 = vsyncadd [#allocation8], %s53
      %s55 = sshll.u32 [#allocation7], 4
      %s56 = int_to_ptr.vmem [resolvable:$true] %s55
      %61 = dma.hbm_to_vmem [thread:$0]  %s3, 16384, %s56, [#allocation8], 128, 128, 8
    $region17: #{net_forward.1} parent=1 // pred_fallthru
      _
    // Predicated region
    $region18: #{net_forward.1} parent=1 // pred_check
      _
    $region19: #{net_forward.1} parent=1 // pred_check_branch
      %63 = sbr.rel (0) target = $region21
    $region20: #{net_forward.1} parent=1 // pred_region
      _
    $region21: #{net_forward.1} parent=1 // pred_fallthru
      _
    // Predicated region
    $region22: #{net_forward.1} parent=1 // pred_check
      _
    $region23: #{net_forward.1} parent=1 // pred_check_branch
      %65 = sbr.rel (0) target = $region25
    $region24: #{net_forward.1} parent=1 // pred_region
      %s67 = ssub.s32 4096, 4096
      %68 = vsyncadd [#allocation8], %s67
      %s69 = sshll.u32 [#allocation9], 4
      %s70 = int_to_ptr.vmem [resolvable:$true] %s69
      %75 = dma.hbm_to_vmem [thread:$0]  %s5, 4096, %s70, [#allocation8], 128, 128, 8
    $region25: #{net_forward.1} parent=1 // pred_fallthru
      _
    // Predicated region
    $region26: #{net_forward.1} parent=1 // pred_check
      _
    $region27: #{net_forward.1} parent=1 // pred_check_branch
      %77 = sbr.rel (0) target = $region29
    $region28: #{net_forward.1} parent=1 // pred_region
      _
    $region29: #{net_forward.1} parent=1 // pred_fallthru
      _
    // Predicated region
    $region30: #{net_forward.1} parent=1 // pred_check
      _
    $region31: #{net_forward.1} parent=1 // pred_check_branch
      %79 = sbr.rel (0) target = $region33
    $region32: #{net_forward.1} parent=1 // pred_region
      %s81 = ssub.s32 2048, 2048
      %82 = vsyncadd [#allocation11], %s81
      %s83 = sshll.u32 [#allocation10], 4
      %s84 = int_to_ptr.vmem [resolvable:$true] %s83
      %89 = dma.hbm_to_vmem [thread:$0]  %s7, 2048, %s84, [#allocation11], 64, 64, 4
    $region33: #{net_forward.1} parent=1 // pred_fallthru
      _
    // Predicated region
    $region34: #{net_forward.1} parent=1 // pred_check
      _
    $region35: #{net_forward.1} parent=1 // pred_check_branch
      %91 = sbr.rel (0) target = $region37
    $region36: #{net_forward.1} parent=1 // pred_region
      _
    $region37: #{net_forward.1} parent=1 // pred_fallthru
      _
    // Predicated region
    $region38: #{net_forward.1} parent=1 // pred_check
      _
    $region39: #{net_forward.1} parent=1 // pred_check_branch
      %93 = sbr.rel (0) target = $region41
    $region40: #{net_forward.1} parent=1 // pred_region
      %94 = dma.done [#allocation3], 128
    $region41: #{net_forward.1} parent=1 // pred_fallthru
      _
    // Predicated region
    $region42: #{net_forward.1} parent=1 // pred_check
      _
    $region43: #{net_forward.1} parent=1 // pred_check_branch
      %96 = sbr.rel (0) target = $region45
    $region44: #{net_forward.1} parent=1 // pred_region
      %97 = dma.done [#allocation5], 8192
    $region45: #{net_forward.1} parent=1 // pred_fallthru
      _
    // Predicated region
    $region46: #{net_forward.1} parent=1 // pred_check
      _
    $region47: #{net_forward.1} parent=1 // pred_check_branch
      %99 = sbr.rel (0) target = $region49
    $region48: #{net_forward.1} parent=1 // pred_region
      %100 = dma.done [#allocation5], 128
    $region49: #{net_forward.1} parent=1 // pred_fallthru
      _
    // Predicated region
    $region50: #{net_forward.1} parent=1 // pred_check
      _
    $region51: #{net_forward.1} parent=1 // pred_check_branch
      %102 = sbr.rel (0) target = $region53
    $region52: #{net_forward.1} parent=1 // pred_region
      %103 = dma.done [#allocation8], 16384
    $region53: #{net_forward.1} parent=1 // pred_fallthru
      _
    // Predicated region
    $region54: #{net_forward.1} parent=1 // pred_check
      _
    $region55: #{net_forward.1} parent=1 // pred_check_branch
      %105 = sbr.rel (0) target = $region57
    $region56: #{net_forward.1} parent=1 // pred_region
      %106 = dma.done [#allocation8], 4096
    $region57: #{net_forward.1} parent=1 // pred_fallthru
      _
    // Predicated region
    $region58: #{net_forward.1} parent=1 // pred_check
      _
    $region59: #{net_forward.1} parent=1 // pred_check_branch
      %108 = sbr.rel (0) target = $region61
    $region60: #{net_forward.1} parent=1 // pred_region
      %109 = dma.done [#allocation11], 2048
    $region61: #{net_forward.1} parent=1 // pred_fallthru
      _
    %v111 = vld [vmem:[#allocation2] sm:$0xff]
    %v112 = vpack.c.bf16 %v111, %v111
    %v113 = vld [vmem:[#allocation4] sm:$0xff]
    %v114 = vld [vmem:[#allocation4 + $0x8] sm:$0xff]
    %v115 = vld [vmem:[#allocation4 + $0x10] sm:$0xff]
    %v116 = vld [vmem:[#allocation4 + $0x18] sm:$0xff]
    %v117 = vld [vmem:[#allocation4 + $0x20] sm:$0xff]
    %v118 = vld [vmem:[#allocation4 + $0x28] sm:$0xff]
    %v119 = vld [vmem:[#allocation4 + $0x30] sm:$0xff]
    %v120 = vld [vmem:[#allocation4 + $0x38] sm:$0xff]
    %v121 = vld [vmem:[#allocation4 + $0x40] sm:$0xff]
    %v122 = vld [vmem:[#allocation4 + $0x48] sm:$0xff]
    %v123 = vld [vmem:[#allocation4 + $0x50] sm:$0xff]
    %v124 = vld [vmem:[#allocation4 + $0x58] sm:$0xff]
    %v125 = vld [vmem:[#allocation4 + $0x60] sm:$0xff]
    %v126 = vld [vmem:[#allocation4 + $0x68] sm:$0xff]
    %v127 = vld [vmem:[#allocation4 + $0x70] sm:$0xff]
    %v128 = vld [vmem:[#allocation4 + $0x78] sm:$0xff]
    %v129 = vld [vmem:[#allocation4 + $0x80] sm:$0xff]
    %v130 = vld [vmem:[#allocation4 + $0x88] sm:$0xff]
    %v131 = vld [vmem:[#allocation4 + $0x90] sm:$0xff]
    %v132 = vld [vmem:[#allocation4 + $0x98] sm:$0xff]
    %v133 = vld [vmem:[#allocation4 + $0xa0] sm:$0xff]
    %v134 = vld [vmem:[#allocation4 + $0xa8] sm:$0xff]
    %v135 = vld [vmem:[#allocation4 + $0xb0] sm:$0xff]
    %v136 = vld [vmem:[#allocation4 + $0xb8] sm:$0xff]
    %v137 = vld [vmem:[#allocation4 + $0xc0] sm:$0xff]
    %v138 = vld [vmem:[#allocation4 + $0xc8] sm:$0xff]
    %v139 = vld [vmem:[#allocation4 + $0xd0] sm:$0xff]
    %v140 = vld [vmem:[#allocation4 + $0xd8] sm:$0xff]
    %v141 = vld [vmem:[#allocation4 + $0xe0] sm:$0xff]
    %v142 = vld [vmem:[#allocation4 + $0xe8] sm:$0xff]
    %v143 = vld [vmem:[#allocation4 + $0xf0] sm:$0xff]
    %v144 = vld [vmem:[#allocation4 + $0xf8] sm:$0xff]
    %v145 = vld [vmem:[#allocation4 + $0x100] sm:$0xff]
    %v146 = vld [vmem:[#allocation4 + $0x108] sm:$0xff]
    %v147 = vld [vmem:[#allocation4 + $0x110] sm:$0xff]
    %v148 = vld [vmem:[#allocation4 + $0x118] sm:$0xff]
    %v149 = vld [vmem:[#allocation4 + $0x120] sm:$0xff]
    %v150 = vld [vmem:[#allocation4 + $0x128] sm:$0xff]
    %v151 = vld [vmem:[#allocation4 + $0x130] sm:$0xff]
    %v152 = vld [vmem:[#allocation4 + $0x138] sm:$0xff]
    %v153 = vld [vmem:[#allocation4 + $0x140] sm:$0xff]
    %v154 = vld [vmem:[#allocation4 + $0x148] sm:$0xff]
    %v155 = vld [vmem:[#allocation4 + $0x150] sm:$0xff]
    %v156 = vld [vmem:[#allocation4 + $0x158] sm:$0xff]
    %v157 = vld [vmem:[#allocation4 + $0x160] sm:$0xff]
    %v158 = vld [vmem:[#allocation4 + $0x168] sm:$0xff]
    %v159 = vld [vmem:[#allocation4 + $0x170] sm:$0xff]
    %v160 = vld [vmem:[#allocation4 + $0x178] sm:$0xff]
    %v161 = vld [vmem:[#allocation4 + $0x180] sm:$0xff]
    %v162 = vld [vmem:[#allocation4 + $0x188] sm:$0xff]
    %v163 = vld [vmem:[#allocation4 + $0x190] sm:$0xff]
    %v164 = vld [vmem:[#allocation4 + $0x198] sm:$0xff]
    %v165 = vld [vmem:[#allocation4 + $0x1a0] sm:$0xff]
    %v166 = vld [vmem:[#allocation4 + $0x1a8] sm:$0xff]
    %v167 = vld [vmem:[#allocation4 + $0x1b0] sm:$0xff]
    %v168 = vld [vmem:[#allocation4 + $0x1b8] sm:$0xff]
    %v169 = vld [vmem:[#allocation4 + $0x1c0] sm:$0xff]
    %v170 = vld [vmem:[#allocation4 + $0x1c8] sm:$0xff]
    %v171 = vld [vmem:[#allocation4 + $0x1d0] sm:$0xff]
    %v172 = vld [vmem:[#allocation4 + $0x1d8] sm:$0xff]
    %v173 = vld [vmem:[#allocation4 + $0x1e0] sm:$0xff]
    %v174 = vld [vmem:[#allocation4 + $0x1e8] sm:$0xff]
    %v175 = vld [vmem:[#allocation4 + $0x1f0] sm:$0xff]
    %v176 = vld [vmem:[#allocation4 + $0x1f8] sm:$0xff]
    %v177 = vld [vmem:[#allocation6] sm:$0xff]
    %v179 = vlaneseq
    %v180 = vshrl.u32 %v179, 7
    %v181 = vsub.s32 0, %v180
    %v182 = vrot.slane %v177, %v181
    %v183 = vlaneseq
    %v184 = vshrl.u32 %v183, 7
    %v185 = vsub.s32 1, %v184
    %v186 = vrot.slane %v177, %v185
    %v187 = vlaneseq
    %v188 = vshrl.u32 %v187, 7
    %v189 = vsub.s32 2, %v188
    %v190 = vrot.slane %v177, %v189
    %v191 = vlaneseq
    %v192 = vshrl.u32 %v191, 7
    %v193 = vsub.s32 3, %v192
    %v194 = vrot.slane %v177, %v193
    %v195 = vlaneseq
    %v196 = vshrl.u32 %v195, 7
    %v197 = vsub.s32 4, %v196
    %v198 = vrot.slane %v177, %v197
    %v199 = vlaneseq
    %v200 = vshrl.u32 %v199, 7
    %v201 = vsub.s32 5, %v200
    %v202 = vrot.slane %v177, %v201
    %v203 = vlaneseq
    %v204 = vshrl.u32 %v203, 7
    %v205 = vsub.s32 6, %v204
    %v206 = vrot.slane %v177, %v205
    %v207 = vlaneseq
    %v208 = vshrl.u32 %v207, 7
    %v209 = vsub.s32 7, %v208
    %v210 = vrot.slane %v177, %v209
    %v283 = vunpack.c.l.b16 %v113
    %v284 = vunpack.c.h.b16 %v113
    %v285 = vunpack.c.l.b16 %v114
    %v286 = vunpack.c.h.b16 %v114
    %v287 = vunpack.c.l.b16 %v115
    %v288 = vunpack.c.h.b16 %v115
    %v289 = vunpack.c.l.b16 %v116
    %v290 = vunpack.c.h.b16 %v116
    %v291 = vunpack.c.l.b16 %v117
    %v292 = vunpack.c.h.b16 %v117
    %v293 = vunpack.c.l.b16 %v118
    %v294 = vunpack.c.h.b16 %v118
    %v295 = vunpack.c.l.b16 %v119
    %v296 = vunpack.c.h.b16 %v119
    %v297 = vunpack.c.l.b16 %v120
    %v298 = vunpack.c.h.b16 %v120
    %v299 = vunpack.c.l.b16 %v121
    %v300 = vunpack.c.h.b16 %v121
    %v301 = vunpack.c.l.b16 %v122
    %v302 = vunpack.c.h.b16 %v122
    %v303 = vunpack.c.l.b16 %v123
    %v304 = vunpack.c.h.b16 %v123
    %v305 = vunpack.c.l.b16 %v124
    %v306 = vunpack.c.h.b16 %v124
    %v307 = vunpack.c.l.b16 %v125
    %v308 = vunpack.c.h.b16 %v125
    %v309 = vunpack.c.l.b16 %v126
    %v310 = vunpack.c.h.b16 %v126
    %v311 = vunpack.c.l.b16 %v127
    %v312 = vunpack.c.h.b16 %v127
    %v313 = vunpack.c.l.b16 %v128
    %v314 = vunpack.c.h.b16 %v128
    %v315 = vunpack.c.l.b16 %v129
    %v316 = vunpack.c.h.b16 %v129
    %v317 = vunpack.c.l.b16 %v130
    %v318 = vunpack.c.h.b16 %v130
    %v319 = vunpack.c.l.b16 %v131
    %v320 = vunpack.c.h.b16 %v131
    %v321 = vunpack.c.l.b16 %v132
    %v322 = vunpack.c.h.b16 %v132
    %v323 = vunpack.c.l.b16 %v133
    %v324 = vunpack.c.h.b16 %v133
    %v325 = vunpack.c.l.b16 %v134
    %v326 = vunpack.c.h.b16 %v134
    %v327 = vunpack.c.l.b16 %v135
    %v328 = vunpack.c.h.b16 %v135
    %v329 = vunpack.c.l.b16 %v136
    %v330 = vunpack.c.h.b16 %v136
    %v331 = vunpack.c.l.b16 %v137
    %v332 = vunpack.c.h.b16 %v137
    %v333 = vunpack.c.l.b16 %v138
    %v334 = vunpack.c.h.b16 %v138
    %v335 = vunpack.c.l.b16 %v139
    %v336 = vunpack.c.h.b16 %v139
    %v337 = vunpack.c.l.b16 %v140
    %v338 = vunpack.c.h.b16 %v140
    %v339 = vunpack.c.l.b16 %v141
    %v340 = vunpack.c.h.b16 %v141
    %v341 = vunpack.c.l.b16 %v142
    %v342 = vunpack.c.h.b16 %v142
    %v343 = vunpack.c.l.b16 %v143
    %v344 = vunpack.c.h.b16 %v143
    %v345 = vunpack.c.l.b16 %v144
    %v346 = vunpack.c.h.b16 %v144
    %v347 = vunpack.c.l.b16 %v145
    %v348 = vunpack.c.h.b16 %v145
    %v349 = vunpack.c.l.b16 %v146
    %v350 = vunpack.c.h.b16 %v146
    %v351 = vunpack.c.l.b16 %v147
    %v352 = vunpack.c.h.b16 %v147
    %v353 = vunpack.c.l.b16 %v148
    %v354 = vunpack.c.h.b16 %v148
    %v355 = vunpack.c.l.b16 %v149
    %v356 = vunpack.c.h.b16 %v149
    %v357 = vunpack.c.l.b16 %v150
    %v358 = vunpack.c.h.b16 %v150
    %v359 = vunpack.c.l.b16 %v151
    %v360 = vunpack.c.h.b16 %v151
    %v361 = vunpack.c.l.b16 %v152
    %v362 = vunpack.c.h.b16 %v152
    %v363 = vunpack.c.l.b16 %v153
    %v364 = vunpack.c.h.b16 %v153
    %v365 = vunpack.c.l.b16 %v154
    %v366 = vunpack.c.h.b16 %v154
    %v367 = vunpack.c.l.b16 %v155
    %v368 = vunpack.c.h.b16 %v155
    %v369 = vunpack.c.l.b16 %v156
    %v370 = vunpack.c.h.b16 %v156
    %v371 = vunpack.c.l.b16 %v157
    %v372 = vunpack.c.h.b16 %v157
    %v373 = vunpack.c.l.b16 %v158
    %v374 = vunpack.c.h.b16 %v158
    %v375 = vunpack.c.l.b16 %v159
    %v376 = vunpack.c.h.b16 %v159
    %v377 = vunpack.c.l.b16 %v160
    %v378 = vunpack.c.h.b16 %v160
    %v379 = vunpack.c.l.b16 %v161
    %v380 = vunpack.c.h.b16 %v161
    %v381 = vunpack.c.l.b16 %v162
    %v382 = vunpack.c.h.b16 %v162
    %v383 = vunpack.c.l.b16 %v163
    %v384 = vunpack.c.h.b16 %v163
    %v385 = vunpack.c.l.b16 %v164
    %v386 = vunpack.c.h.b16 %v164
    %v387 = vunpack.c.l.b16 %v165
    %v388 = vunpack.c.h.b16 %v165
    %v389 = vunpack.c.l.b16 %v166
    %v390 = vunpack.c.h.b16 %v166
    %v391 = vunpack.c.l.b16 %v167
    %v392 = vunpack.c.h.b16 %v167
    %v393 = vunpack.c.l.b16 %v168
    %v394 = vunpack.c.h.b16 %v168
    %v395 = vunpack.c.l.b16 %v169
    %v396 = vunpack.c.h.b16 %v169
    %v397 = vunpack.c.l.b16 %v170
    %v398 = vunpack.c.h.b16 %v170
    %v399 = vunpack.c.l.b16 %v171
    %v400 = vunpack.c.h.b16 %v171
    %v401 = vunpack.c.l.b16 %v172
    %v402 = vunpack.c.h.b16 %v172
    %v403 = vunpack.c.l.b16 %v173
    %v404 = vunpack.c.h.b16 %v173
    %v405 = vunpack.c.l.b16 %v174
    %v406 = vunpack.c.h.b16 %v174
    %v407 = vunpack.c.l.b16 %v175
    %v408 = vunpack.c.h.b16 %v175
    %v409 = vunpack.c.l.b16 %v176
    %v410 = vunpack.c.h.b16 %v176
    %v411 = vpack.c.b16 %v291, %v283
    %v412 = vpack.c.b16 %v292, %v284
    %v413 = vpack.c.b16 %v293, %v285
    %v414 = vpack.c.b16 %v294, %v286
    %v415 = vpack.c.b16 %v295, %v287
    %v416 = vpack.c.b16 %v296, %v288
    %v417 = vpack.c.b16 %v297, %v289
    %v418 = vpack.c.b16 %v298, %v290
    %v419 = vpack.c.b16 %v307, %v299
    %v420 = vpack.c.b16 %v308, %v300
    %v421 = vpack.c.b16 %v309, %v301
    %v422 = vpack.c.b16 %v310, %v302
    %v423 = vpack.c.b16 %v311, %v303
    %v424 = vpack.c.b16 %v312, %v304
    %v425 = vpack.c.b16 %v313, %v305
    %v426 = vpack.c.b16 %v314, %v306
    %v427 = vpack.c.b16 %v323, %v315
    %v428 = vpack.c.b16 %v324, %v316
    %v429 = vpack.c.b16 %v325, %v317
    %v430 = vpack.c.b16 %v326, %v318
    %v431 = vpack.c.b16 %v327, %v319
    %v432 = vpack.c.b16 %v328, %v320
    %v433 = vpack.c.b16 %v329, %v321
    %v434 = vpack.c.b16 %v330, %v322
    %v435 = vpack.c.b16 %v339, %v331
    %v436 = vpack.c.b16 %v340, %v332
    %v437 = vpack.c.b16 %v341, %v333
    %v438 = vpack.c.b16 %v342, %v334
    %v439 = vpack.c.b16 %v343, %v335
    %v440 = vpack.c.b16 %v344, %v336
    %v441 = vpack.c.b16 %v345, %v337
    %v442 = vpack.c.b16 %v346, %v338
    %v443 = vpack.c.b16 %v355, %v347
    %v444 = vpack.c.b16 %v356, %v348
    %v445 = vpack.c.b16 %v357, %v349
    %v446 = vpack.c.b16 %v358, %v350
    %v447 = vpack.c.b16 %v359, %v351
    %v448 = vpack.c.b16 %v360, %v352
    %v449 = vpack.c.b16 %v361, %v353
    %v450 = vpack.c.b16 %v362, %v354
    %v451 = vpack.c.b16 %v371, %v363
    %v452 = vpack.c.b16 %v372, %v364
    %v453 = vpack.c.b16 %v373, %v365
    %v454 = vpack.c.b16 %v374, %v366
    %v455 = vpack.c.b16 %v375, %v367
    %v456 = vpack.c.b16 %v376, %v368
    %v457 = vpack.c.b16 %v377, %v369
    %v458 = vpack.c.b16 %v378, %v370
    %v459 = vpack.c.b16 %v387, %v379
    %v460 = vpack.c.b16 %v388, %v380
    %v461 = vpack.c.b16 %v389, %v381
    %v462 = vpack.c.b16 %v390, %v382
    %v463 = vpack.c.b16 %v391, %v383
    %v464 = vpack.c.b16 %v392, %v384
    %v465 = vpack.c.b16 %v393, %v385
    %v466 = vpack.c.b16 %v394, %v386
    %v467 = vpack.c.b16 %v403, %v395
    %v468 = vpack.c.b16 %v404, %v396
    %v469 = vpack.c.b16 %v405, %v397
    %v470 = vpack.c.b16 %v406, %v398
    %v471 = vpack.c.b16 %v407, %v399
    %v472 = vpack.c.b16 %v408, %v400
    %v473 = vpack.c.b16 %v409, %v401
    %v474 = vpack.c.b16 %v410, %v402
    %539 = vmatprep.subr.bf16.mxu0 %v412
    %540 = vmatpush1.bf16.msra.mxu0 %v411
    %541 = vmatprep.subr.bf16.mxu0 %v420
    %542 = vmatpush1.bf16.msra.mxu0 %v419
    %543 = vmatprep.subr.bf16.mxu0 %v428
    %544 = vmatpush1.bf16.msra.mxu0 %v427
    %545 = vmatprep.subr.bf16.mxu0 %v436
    %546 = vmatpush1.bf16.msra.mxu0 %v435
    %547 = vmatprep.subr.bf16.mxu0 %v444
    %548 = vmatpush1.bf16.msra.mxu0 %v443
    %549 = vmatprep.subr.bf16.mxu0 %v452
    %550 = vmatpush1.bf16.msra.mxu0 %v451
    %551 = vmatprep.subr.bf16.mxu0 %v460
    %552 = vmatpush1.bf16.msra.mxu0 %v459
    %553 = vmatprep.subr.bf16.mxu0 %v468
    %554 = vmatpush1.bf16.msra.mxu0 %v467
    %555 = vmatprep.subr.bf16.mxu0 0
    %556 = vmatpush1.bf16.msra.mxu0 0
    %557 = vmatprep.subr.bf16.mxu0 0
    %558 = vmatpush1.bf16.msra.mxu0 0
    %559 = vmatprep.subr.bf16.mxu0 0
    %560 = vmatpush1.bf16.msra.mxu0 0
    %561 = vmatprep.subr.bf16.mxu0 0
    %562 = vmatpush1.bf16.msra.mxu0 0
    %563 = vmatprep.subr.bf16.mxu0 0
    %564 = vmatpush1.bf16.msra.mxu0 0
    %565 = vmatprep.subr.bf16.mxu0 0
    %566 = vmatpush1.bf16.msra.mxu0 0
    %567 = vmatprep.subr.bf16.mxu0 0
    %568 = vmatpush1.bf16.msra.mxu0 0
    %569 = vmatprep.subr.bf16.mxu0 0
    %570 = vmatpush1.bf16.msra.mxu0 0
    %571 = vmatprep.mubr.bf16.mxu0 0
    %572 = vmatmul.mubr.bf16.gmra.mrb[0].mxu0 %v112
    %v573 = vpop.f32.mrb[0].mxu0
    %v574 = vadd.f32 %v182, %v573
    %v575 = vpop.f32.mrb[0].mxu0
    %v576 = vadd.f32 %v186, %v575
    %v577 = vpop.f32.mrb[0].mxu0
    %v578 = vpop.f32.mrb[0].mxu0
    %579 = vdwg.mxu0
    %580 = vmatprep.subr.bf16.mxu0 %v414
    %581 = vmatpush1.bf16.msra.mxu0 %v413
    %582 = vmatprep.subr.bf16.mxu0 %v422
    %583 = vmatpush1.bf16.msra.mxu0 %v421
    %584 = vmatprep.subr.bf16.mxu0 %v430
    %585 = vmatpush1.bf16.msra.mxu0 %v429
    %586 = vmatprep.subr.bf16.mxu0 %v438
    %587 = vmatpush1.bf16.msra.mxu0 %v437
    %588 = vmatprep.subr.bf16.mxu0 %v446
    %589 = vmatpush1.bf16.msra.mxu0 %v445
    %590 = vmatprep.subr.bf16.mxu0 %v454
    %591 = vmatpush1.bf16.msra.mxu0 %v453
    %592 = vmatprep.subr.bf16.mxu0 %v462
    %593 = vmatpush1.bf16.msra.mxu0 %v461
    %594 = vmatprep.subr.bf16.mxu0 %v470
    %595 = vmatpush1.bf16.msra.mxu0 %v469
    %596 = vmatprep.subr.bf16.mxu0 0
    %597 = vmatpush1.bf16.msra.mxu0 0
    %598 = vmatprep.subr.bf16.mxu0 0
    %599 = vmatpush1.bf16.msra.mxu0 0
    %600 = vmatprep.subr.bf16.mxu0 0
    %601 = vmatpush1.bf16.msra.mxu0 0
    %602 = vmatprep.subr.bf16.mxu0 0
    %603 = vmatpush1.bf16.msra.mxu0 0
    %604 = vmatprep.subr.bf16.mxu0 0
    %605 = vmatpush1.bf16.msra.mxu0 0
    %606 = vmatprep.subr.bf16.mxu0 0
    %607 = vmatpush1.bf16.msra.mxu0 0
    %608 = vmatprep.subr.bf16.mxu0 0
    %609 = vmatpush1.bf16.msra.mxu0 0
    %610 = vmatprep.subr.bf16.mxu0 0
    %611 = vmatpush1.bf16.msra.mxu0 0
    %612 = vmatprep.mubr.bf16.mxu0 0
    %613 = vmatmul.mubr.bf16.gmra.mrb[0].mxu0 %v112
    %v614 = vpop.f32.mrb[0].mxu0
    %v615 = vadd.f32 %v190, %v614
    %v616 = vpop.f32.mrb[0].mxu0
    %v617 = vadd.f32 %v194, %v616
    %v618 = vpop.f32.mrb[0].mxu0
    %v619 = vpop.f32.mrb[0].mxu0
    %620 = vdwg.mxu0
    %621 = vmatprep.subr.bf16.mxu0 %v416
    %622 = vmatpush1.bf16.msra.mxu0 %v415
    %623 = vmatprep.subr.bf16.mxu0 %v424
    %624 = vmatpush1.bf16.msra.mxu0 %v423
    %625 = vmatprep.subr.bf16.mxu0 %v432
    %626 = vmatpush1.bf16.msra.mxu0 %v431
    %627 = vmatprep.subr.bf16.mxu0 %v440
    %628 = vmatpush1.bf16.msra.mxu0 %v439
    %629 = vmatprep.subr.bf16.mxu0 %v448
    %630 = vmatpush1.bf16.msra.mxu0 %v447
    %631 = vmatprep.subr.bf16.mxu0 %v456
    %632 = vmatpush1.bf16.msra.mxu0 %v455
    %633 = vmatprep.subr.bf16.mxu0 %v464
    %634 = vmatpush1.bf16.msra.mxu0 %v463
    %635 = vmatprep.subr.bf16.mxu0 %v472
    %636 = vmatpush1.bf16.msra.mxu0 %v471
    %637 = vmatprep.subr.bf16.mxu0 0
    %638 = vmatpush1.bf16.msra.mxu0 0
    %639 = vmatprep.subr.bf16.mxu0 0
    %640 = vmatpush1.bf16.msra.mxu0 0
    %641 = vmatprep.subr.bf16.mxu0 0
    %642 = vmatpush1.bf16.msra.mxu0 0
    %643 = vmatprep.subr.bf16.mxu0 0
    %644 = vmatpush1.bf16.msra.mxu0 0
    %645 = vmatprep.subr.bf16.mxu0 0
    %646 = vmatpush1.bf16.msra.mxu0 0
    %647 = vmatprep.subr.bf16.mxu0 0
    %648 = vmatpush1.bf16.msra.mxu0 0
    %649 = vmatprep.subr.bf16.mxu0 0
    %650 = vmatpush1.bf16.msra.mxu0 0
    %651 = vmatprep.subr.bf16.mxu0 0
    %652 = vmatpush1.bf16.msra.mxu0 0
    %653 = vmatprep.mubr.bf16.mxu0 0
    %654 = vmatmul.mubr.bf16.gmra.mrb[0].mxu0 %v112
    %v655 = vpop.f32.mrb[0].mxu0
    %v656 = vadd.f32 %v198, %v655
    %v657 = vpop.f32.mrb[0].mxu0
    %v658 = vadd.f32 %v202, %v657
    %v659 = vpop.f32.mrb[0].mxu0
    %v660 = vpop.f32.mrb[0].mxu0
    %661 = vdwg.mxu0
    %662 = vmatprep.subr.bf16.mxu0 %v418
    %663 = vmatpush1.bf16.msra.mxu0 %v417
    %664 = vmatprep.subr.bf16.mxu0 %v426
    %665 = vmatpush1.bf16.msra.mxu0 %v425
    %666 = vmatprep.subr.bf16.mxu0 %v434
    %667 = vmatpush1.bf16.msra.mxu0 %v433
    %668 = vmatprep.subr.bf16.mxu0 %v442
    %669 = vmatpush1.bf16.msra.mxu0 %v441
    %670 = vmatprep.subr.bf16.mxu0 %v450
    %671 = vmatpush1.bf16.msra.mxu0 %v449
    %672 = vmatprep.subr.bf16.mxu0 %v458
    %673 = vmatpush1.bf16.msra.mxu0 %v457
    %674 = vmatprep.subr.bf16.mxu0 %v466
    %675 = vmatpush1.bf16.msra.mxu0 %v465
    %676 = vmatprep.subr.bf16.mxu0 %v474
    %677 = vmatpush1.bf16.msra.mxu0 %v473
    %678 = vmatprep.subr.bf16.mxu0 0
    %679 = vmatpush1.bf16.msra.mxu0 0
    %680 = vmatprep.subr.bf16.mxu0 0
    %681 = vmatpush1.bf16.msra.mxu0 0
    %682 = vmatprep.subr.bf16.mxu0 0
    %683 = vmatpush1.bf16.msra.mxu0 0
    %684 = vmatprep.subr.bf16.mxu0 0
    %685 = vmatpush1.bf16.msra.mxu0 0
    %686 = vmatprep.subr.bf16.mxu0 0
    %687 = vmatpush1.bf16.msra.mxu0 0
    %688 = vmatprep.subr.bf16.mxu0 0
    %689 = vmatpush1.bf16.msra.mxu0 0
    %690 = vmatprep.subr.bf16.mxu0 0
    %691 = vmatpush1.bf16.msra.mxu0 0
    %692 = vmatprep.subr.bf16.mxu0 0
    %693 = vmatpush1.bf16.msra.mxu0 0
    %694 = vmatprep.mubr.bf16.mxu0 0
    %695 = vmatmul.mubr.bf16.gmra.mrb[0].mxu0 %v112
    %v696 = vpop.f32.mrb[0].mxu0
    %v697 = vadd.f32 %v206, %v696
    %v698 = vpop.f32.mrb[0].mxu0
    %v699 = vadd.f32 %v210, %v698
    %v700 = vpop.f32.mrb[0].mxu0
    %v701 = vpop.f32.mrb[0].mxu0
    %702 = vdwg.mxu0
    %v703 = vmax.f32 %v574, 0.0
    %v704 = vmax.f32 %v576, 0.0
    %v705 = vmax.f32 %v615, 0.0
    %v706 = vmax.f32 %v617, 0.0
    %v707 = vmax.f32 %v656, 0.0
    %v708 = vmax.f32 %v658, 0.0
    %v709 = vmax.f32 %v697, 0.0
    %v710 = vmax.f32 %v699, 0.0
    %v711 = vpack.c.bf16 %v703, %v703
    %v712 = vpack.c.bf16 %v704, %v704
    %v713 = vpack.c.bf16 %v705, %v705
    %v714 = vpack.c.bf16 %v706, %v706
    %v715 = vpack.c.bf16 %v707, %v707
    %v716 = vpack.c.bf16 %v708, %v708
    %v717 = vpack.c.bf16 %v709, %v709
    %v718 = vpack.c.bf16 %v710, %v710
    %v719 = vld [vmem:[#allocation7] sm:$0xff]
    %v720 = vld [vmem:[#allocation7 + $0x8] sm:$0xff]
    %v721 = vld [vmem:[#allocation7 + $0x10] sm:$0xff]
    %v722 = vld [vmem:[#allocation7 + $0x18] sm:$0xff]
    %v723 = vld [vmem:[#allocation7 + $0x20] sm:$0xff]
    %v724 = vld [vmem:[#allocation7 + $0x28] sm:$0xff]
    %v725 = vld [vmem:[#allocation7 + $0x30] sm:$0xff]
    %v726 = vld [vmem:[#allocation7 + $0x38] sm:$0xff]
    %v727 = vld [vmem:[#allocation7 + $0x40] sm:$0xff]
    %v728 = vld [vmem:[#allocation7 + $0x48] sm:$0xff]
    %v729 = vld [vmem:[#allocation7 + $0x50] sm:$0xff]
    %v730 = vld [vmem:[#allocation7 + $0x58] sm:$0xff]
    %v731 = vld [vmem:[#allocation7 + $0x60] sm:$0xff]
    %v732 = vld [vmem:[#allocation7 + $0x68] sm:$0xff]
    %v733 = vld [vmem:[#allocation7 + $0x70] sm:$0xff]
    %v734 = vld [vmem:[#allocation7 + $0x78] sm:$0xff]
    %v735 = vld [vmem:[#allocation7 + $0x80] sm:$0xff]
    %v736 = vld [vmem:[#allocation7 + $0x88] sm:$0xff]
    %v737 = vld [vmem:[#allocation7 + $0x90] sm:$0xff]
    %v738 = vld [vmem:[#allocation7 + $0x98] sm:$0xff]
    %v739 = vld [vmem:[#allocation7 + $0xa0] sm:$0xff]
    %v740 = vld [vmem:[#allocation7 + $0xa8] sm:$0xff]
    %v741 = vld [vmem:[#allocation7 + $0xb0] sm:$0xff]
    %v742 = vld [vmem:[#allocation7 + $0xb8] sm:$0xff]
    %v743 = vld [vmem:[#allocation7 + $0xc0] sm:$0xff]
    %v744 = vld [vmem:[#allocation7 + $0xc8] sm:$0xff]
    %v745 = vld [vmem:[#allocation7 + $0xd0] sm:$0xff]
    %v746 = vld [vmem:[#allocation7 + $0xd8] sm:$0xff]
    %v747 = vld [vmem:[#allocation7 + $0xe0] sm:$0xff]
    %v748 = vld [vmem:[#allocation7 + $0xe8] sm:$0xff]
    %v749 = vld [vmem:[#allocation7 + $0xf0] sm:$0xff]
    %v750 = vld [vmem:[#allocation7 + $0xf8] sm:$0xff]
    %v751 = vld [vmem:[#allocation7 + $0x100] sm:$0xff]
    %v752 = vld [vmem:[#allocation7 + $0x108] sm:$0xff]
    %v753 = vld [vmem:[#allocation7 + $0x110] sm:$0xff]
    %v754 = vld [vmem:[#allocation7 + $0x118] sm:$0xff]
    %v755 = vld [vmem:[#allocation7 + $0x120] sm:$0xff]
    %v756 = vld [vmem:[#allocation7 + $0x128] sm:$0xff]
    %v757 = vld [vmem:[#allocation7 + $0x130] sm:$0xff]
    %v758 = vld [vmem:[#allocation7 + $0x138] sm:$0xff]
    %v759 = vld [vmem:[#allocation7 + $0x140] sm:$0xff]
    %v760 = vld [vmem:[#allocation7 + $0x148] sm:$0xff]
    %v761 = vld [vmem:[#allocation7 + $0x150] sm:$0xff]
    %v762 = vld [vmem:[#allocation7 + $0x158] sm:$0xff]
    %v763 = vld [vmem:[#allocation7 + $0x160] sm:$0xff]
    %v764 = vld [vmem:[#allocation7 + $0x168] sm:$0xff]
    %v765 = vld [vmem:[#allocation7 + $0x170] sm:$0xff]
    %v766 = vld [vmem:[#allocation7 + $0x178] sm:$0xff]
    %v767 = vld [vmem:[#allocation7 + $0x180] sm:$0xff]
    %v768 = vld [vmem:[#allocation7 + $0x188] sm:$0xff]
    %v769 = vld [vmem:[#allocation7 + $0x190] sm:$0xff]
    %v770 = vld [vmem:[#allocation7 + $0x198] sm:$0xff]
    %v771 = vld [vmem:[#allocation7 + $0x1a0] sm:$0xff]
    %v772 = vld [vmem:[#allocation7 + $0x1a8] sm:$0xff]
    %v773 = vld [vmem:[#allocation7 + $0x1b0] sm:$0xff]
    %v774 = vld [vmem:[#allocation7 + $0x1b8] sm:$0xff]
    %v775 = vld [vmem:[#allocation7 + $0x1c0] sm:$0xff]
    %v776 = vld [vmem:[#allocation7 + $0x1c8] sm:$0xff]
    %v777 = vld [vmem:[#allocation7 + $0x1d0] sm:$0xff]
    %v778 = vld [vmem:[#allocation7 + $0x1d8] sm:$0xff]
    %v779 = vld [vmem:[#allocation7 + $0x1e0] sm:$0xff]
    %v780 = vld [vmem:[#allocation7 + $0x1e8] sm:$0xff]
    %v781 = vld [vmem:[#allocation7 + $0x1f0] sm:$0xff]
    %v782 = vld [vmem:[#allocation7 + $0x1f8] sm:$0xff]
    %v783 = vld [vmem:[#allocation7 + $0x200] sm:$0xff]
    %v784 = vld [vmem:[#allocation7 + $0x208] sm:$0xff]
    %v785 = vld [vmem:[#allocation7 + $0x210] sm:$0xff]
    %v786 = vld [vmem:[#allocation7 + $0x218] sm:$0xff]
    %v787 = vld [vmem:[#allocation7 + $0x220] sm:$0xff]
    %v788 = vld [vmem:[#allocation7 + $0x228] sm:$0xff]
    %v789 = vld [vmem:[#allocation7 + $0x230] sm:$0xff]
    %v790 = vld [vmem:[#allocation7 + $0x238] sm:$0xff]
    %v791 = vld [vmem:[#allocation7 + $0x240] sm:$0xff]
    %v792 = vld [vmem:[#allocation7 + $0x248] sm:$0xff]
    %v793 = vld [vmem:[#allocation7 + $0x250] sm:$0xff]
    %v794 = vld [vmem:[#allocation7 + $0x258] sm:$0xff]
    %v795 = vld [vmem:[#allocation7 + $0x260] sm:$0xff]
    %v796 = vld [vmem:[#allocation7 + $0x268] sm:$0xff]
    %v797 = vld [vmem:[#allocation7 + $0x270] sm:$0xff]
    %v798 = vld [vmem:[#allocation7 + $0x278] sm:$0xff]
    %v799 = vld [vmem:[#allocation7 + $0x280] sm:$0xff]
    %v800 = vld [vmem:[#allocation7 + $0x288] sm:$0xff]
    %v801 = vld [vmem:[#allocation7 + $0x290] sm:$0xff]
    %v802 = vld [vmem:[#allocation7 + $0x298] sm:$0xff]
    %v803 = vld [vmem:[#allocation7 + $0x2a0] sm:$0xff]
    %v804 = vld [vmem:[#allocation7 + $0x2a8] sm:$0xff]
    %v805 = vld [vmem:[#allocation7 + $0x2b0] sm:$0xff]
    %v806 = vld [vmem:[#allocation7 + $0x2b8] sm:$0xff]
    %v807 = vld [vmem:[#allocation7 + $0x2c0] sm:$0xff]
    %v808 = vld [vmem:[#allocation7 + $0x2c8] sm:$0xff]
    %v809 = vld [vmem:[#allocation7 + $0x2d0] sm:$0xff]
    %v810 = vld [vmem:[#allocation7 + $0x2d8] sm:$0xff]
    %v811 = vld [vmem:[#allocation7 + $0x2e0] sm:$0xff]
    %v812 = vld [vmem:[#allocation7 + $0x2e8] sm:$0xff]
    %v813 = vld [vmem:[#allocation7 + $0x2f0] sm:$0xff]
    %v814 = vld [vmem:[#allocation7 + $0x2f8] sm:$0xff]
    %v815 = vld [vmem:[#allocation7 + $0x300] sm:$0xff]
    %v816 = vld [vmem:[#allocation7 + $0x308] sm:$0xff]
    %v817 = vld [vmem:[#allocation7 + $0x310] sm:$0xff]
    %v818 = vld [vmem:[#allocation7 + $0x318] sm:$0xff]
    %v819 = vld [vmem:[#allocation7 + $0x320] sm:$0xff]
    %v820 = vld [vmem:[#allocation7 + $0x328] sm:$0xff]
    %v821 = vld [vmem:[#allocation7 + $0x330] sm:$0xff]
    %v822 = vld [vmem:[#allocation7 + $0x338] sm:$0xff]
    %v823 = vld [vmem:[#allocation7 + $0x340] sm:$0xff]
    %v824 = vld [vmem:[#allocation7 + $0x348] sm:$0xff]
    %v825 = vld [vmem:[#allocation7 + $0x350] sm:$0xff]
    %v826 = vld [vmem:[#allocation7 + $0x358] sm:$0xff]
    %v827 = vld [vmem:[#allocation7 + $0x360] sm:$0xff]
    %v828 = vld [vmem:[#allocation7 + $0x368] sm:$0xff]
    %v829 = vld [vmem:[#allocation7 + $0x370] sm:$0xff]
    %v830 = vld [vmem:[#allocation7 + $0x378] sm:$0xff]
    %v831 = vld [vmem:[#allocation7 + $0x380] sm:$0xff]
    %v832 = vld [vmem:[#allocation7 + $0x388] sm:$0xff]
    %v833 = vld [vmem:[#allocation7 + $0x390] sm:$0xff]
    %v834 = vld [vmem:[#allocation7 + $0x398] sm:$0xff]
    %v835 = vld [vmem:[#allocation7 + $0x3a0] sm:$0xff]
    %v836 = vld [vmem:[#allocation7 + $0x3a8] sm:$0xff]
    %v837 = vld [vmem:[#allocation7 + $0x3b0] sm:$0xff]
    %v838 = vld [vmem:[#allocation7 + $0x3b8] sm:$0xff]
    %v839 = vld [vmem:[#allocation7 + $0x3c0] sm:$0xff]
    %v840 = vld [vmem:[#allocation7 + $0x3c8] sm:$0xff]
    %v841 = vld [vmem:[#allocation7 + $0x3d0] sm:$0xff]
    %v842 = vld [vmem:[#allocation7 + $0x3d8] sm:$0xff]
    %v843 = vld [vmem:[#allocation7 + $0x3e0] sm:$0xff]
    %v844 = vld [vmem:[#allocation7 + $0x3e8] sm:$0xff]
    %v845 = vld [vmem:[#allocation7 + $0x3f0] sm:$0xff]
    %v846 = vld [vmem:[#allocation7 + $0x3f8] sm:$0xff]
    %v847 = vld [vmem:[%s4] sm:$0x3]
    %v849 = vlaneseq
    %v850 = vshrl.u32 %v849, 7
    %v851 = vsub.s32 0, %v850
    %v852 = vrot.slane %v847, %v851
    %v853 = vlaneseq
    %v854 = vshrl.u32 %v853, 7
    %v855 = vsub.s32 1, %v854
    %v856 = vrot.slane %v847, %v855
    %v987 = vunpack.c.l.b16 %v719
    %v988 = vunpack.c.h.b16 %v719
    %v989 = vunpack.c.l.b16 %v720
    %v990 = vunpack.c.h.b16 %v720
    %v991 = vunpack.c.l.b16 %v721
    %v992 = vunpack.c.h.b16 %v721
    %v993 = vunpack.c.l.b16 %v722
    %v994 = vunpack.c.h.b16 %v722
    %v995 = vunpack.c.l.b16 %v723
    %v996 = vunpack.c.h.b16 %v723
    %v997 = vunpack.c.l.b16 %v724
    %v998 = vunpack.c.h.b16 %v724
    %v999 = vunpack.c.l.b16 %v725
    %v1000 = vunpack.c.h.b16 %v725
    %v1001 = vunpack.c.l.b16 %v726
    %v1002 = vunpack.c.h.b16 %v726
    %v1003 = vunpack.c.l.b16 %v727
    %v1004 = vunpack.c.h.b16 %v727
    %v1005 = vunpack.c.l.b16 %v728
    %v1006 = vunpack.c.h.b16 %v728
    %v1007 = vunpack.c.l.b16 %v729
    %v1008 = vunpack.c.h.b16 %v729
    %v1009 = vunpack.c.l.b16 %v730
    %v1010 = vunpack.c.h.b16 %v730
    %v1011 = vunpack.c.l.b16 %v731
    %v1012 = vunpack.c.h.b16 %v731
    %v1013 = vunpack.c.l.b16 %v732
    %v1014 = vunpack.c.h.b16 %v732
    %v1015 = vunpack.c.l.b16 %v733
    %v1016 = vunpack.c.h.b16 %v733
    %v1017 = vunpack.c.l.b16 %v734
    %v1018 = vunpack.c.h.b16 %v734
    %v1019 = vunpack.c.l.b16 %v735
    %v1020 = vunpack.c.h.b16 %v735
    %v1021 = vunpack.c.l.b16 %v736
    %v1022 = vunpack.c.h.b16 %v736
    %v1023 = vunpack.c.l.b16 %v737
    %v1024 = vunpack.c.h.b16 %v737
    %v1025 = vunpack.c.l.b16 %v738
    %v1026 = vunpack.c.h.b16 %v738
    %v1027 = vunpack.c.l.b16 %v739
    %v1028 = vunpack.c.h.b16 %v739
    %v1029 = vunpack.c.l.b16 %v740
    %v1030 = vunpack.c.h.b16 %v740
    %v1031 = vunpack.c.l.b16 %v741
    %v1032 = vunpack.c.h.b16 %v741
    %v1033 = vunpack.c.l.b16 %v742
    %v1034 = vunpack.c.h.b16 %v742
    %v1035 = vunpack.c.l.b16 %v743
    %v1036 = vunpack.c.h.b16 %v743
    %v1037 = vunpack.c.l.b16 %v744
    %v1038 = vunpack.c.h.b16 %v744
    %v1039 = vunpack.c.l.b16 %v745
    %v1040 = vunpack.c.h.b16 %v745
    %v1041 = vunpack.c.l.b16 %v746
    %v1042 = vunpack.c.h.b16 %v746
    %v1043 = vunpack.c.l.b16 %v747
    %v1044 = vunpack.c.h.b16 %v747
    %v1045 = vunpack.c.l.b16 %v748
    %v1046 = vunpack.c.h.b16 %v748
    %v1047 = vunpack.c.l.b16 %v749
    %v1048 = vunpack.c.h.b16 %v749
    %v1049 = vunpack.c.l.b16 %v750
    %v1050 = vunpack.c.h.b16 %v750
    %v1051 = vunpack.c.l.b16 %v751
    %v1052 = vunpack.c.h.b16 %v751
    %v1053 = vunpack.c.l.b16 %v752
    %v1054 = vunpack.c.h.b16 %v752
    %v1055 = vunpack.c.l.b16 %v753
    %v1056 = vunpack.c.h.b16 %v753
    %v1057 = vunpack.c.l.b16 %v754
    %v1058 = vunpack.c.h.b16 %v754
    %v1059 = vunpack.c.l.b16 %v755
    %v1060 = vunpack.c.h.b16 %v755
    %v1061 = vunpack.c.l.b16 %v756
    %v1062 = vunpack.c.h.b16 %v756
    %v1063 = vunpack.c.l.b16 %v757
    %v1064 = vunpack.c.h.b16 %v757
    %v1065 = vunpack.c.l.b16 %v758
    %v1066 = vunpack.c.h.b16 %v758
    %v1067 = vunpack.c.l.b16 %v759
    %v1068 = vunpack.c.h.b16 %v759
    %v1069 = vunpack.c.l.b16 %v760
    %v1070 = vunpack.c.h.b16 %v760
    %v1071 = vunpack.c.l.b16 %v761
    %v1072 = vunpack.c.h.b16 %v761
    %v1073 = vunpack.c.l.b16 %v762
    %v1074 = vunpack.c.h.b16 %v762
    %v1075 = vunpack.c.l.b16 %v763
    %v1076 = vunpack.c.h.b16 %v763
    %v1077 = vunpack.c.l.b16 %v764
    %v1078 = vunpack.c.h.b16 %v764
    %v1079 = vunpack.c.l.b16 %v765
    %v1080 = vunpack.c.h.b16 %v765
    %v1081 = vunpack.c.l.b16 %v766
    %v1082 = vunpack.c.h.b16 %v766
    %v1083 = vunpack.c.l.b16 %v767
    %v1084 = vunpack.c.h.b16 %v767
    %v1085 = vunpack.c.l.b16 %v768
    %v1086 = vunpack.c.h.b16 %v768
    %v1087 = vunpack.c.l.b16 %v769
    %v1088 = vunpack.c.h.b16 %v769
    %v1089 = vunpack.c.l.b16 %v770
    %v1090 = vunpack.c.h.b16 %v770
    %v1091 = vunpack.c.l.b16 %v771
    %v1092 = vunpack.c.h.b16 %v771
    %v1093 = vunpack.c.l.b16 %v772
    %v1094 = vunpack.c.h.b16 %v772
    %v1095 = vunpack.c.l.b16 %v773
    %v1096 = vunpack.c.h.b16 %v773
    %v1097 = vunpack.c.l.b16 %v774
    %v1098 = vunpack.c.h.b16 %v774
    %v1099 = vunpack.c.l.b16 %v775
    %v1100 = vunpack.c.h.b16 %v775
    %v1101 = vunpack.c.l.b16 %v776
    %v1102 = vunpack.c.h.b16 %v776
    %v1103 = vunpack.c.l.b16 %v777
    %v1104 = vunpack.c.h.b16 %v777
    %v1105 = vunpack.c.l.b16 %v778
    %v1106 = vunpack.c.h.b16 %v778
    %v1107 = vunpack.c.l.b16 %v779
    %v1108 = vunpack.c.h.b16 %v779
    %v1109 = vunpack.c.l.b16 %v780
    %v1110 = vunpack.c.h.b16 %v780
    %v1111 = vunpack.c.l.b16 %v781
    %v1112 = vunpack.c.h.b16 %v781
    %v1113 = vunpack.c.l.b16 %v782
    %v1114 = vunpack.c.h.b16 %v782
    %v1115 = vunpack.c.l.b16 %v783
    %v1116 = vunpack.c.h.b16 %v783
    %v1117 = vunpack.c.l.b16 %v784
    %v1118 = vunpack.c.h.b16 %v784
    %v1119 = vunpack.c.l.b16 %v785
    %v1120 = vunpack.c.h.b16 %v785
    %v1121 = vunpack.c.l.b16 %v786
    %v1122 = vunpack.c.h.b16 %v786
    %v1123 = vunpack.c.l.b16 %v787
    %v1124 = vunpack.c.h.b16 %v787
    %v1125 = vunpack.c.l.b16 %v788
    %v1126 = vunpack.c.h.b16 %v788
    %v1127 = vunpack.c.l.b16 %v789
    %v1128 = vunpack.c.h.b16 %v789
    %v1129 = vunpack.c.l.b16 %v790
    %v1130 = vunpack.c.h.b16 %v790
    %v1131 = vunpack.c.l.b16 %v791
    %v1132 = vunpack.c.h.b16 %v791
    %v1133 = vunpack.c.l.b16 %v792
    %v1134 = vunpack.c.h.b16 %v792
    %v1135 = vunpack.c.l.b16 %v793
    %v1136 = vunpack.c.h.b16 %v793
    %v1137 = vunpack.c.l.b16 %v794
    %v1138 = vunpack.c.h.b16 %v794
    %v1139 = vunpack.c.l.b16 %v795
    %v1140 = vunpack.c.h.b16 %v795
    %v1141 = vunpack.c.l.b16 %v796
    %v1142 = vunpack.c.h.b16 %v796
    %v1143 = vunpack.c.l.b16 %v797
    %v1144 = vunpack.c.h.b16 %v797
    %v1145 = vunpack.c.l.b16 %v798
    %v1146 = vunpack.c.h.b16 %v798
    %v1147 = vunpack.c.l.b16 %v799
    %v1148 = vunpack.c.h.b16 %v799
    %v1149 = vunpack.c.l.b16 %v800
    %v1150 = vunpack.c.h.b16 %v800
    %v1151 = vunpack.c.l.b16 %v801
    %v1152 = vunpack.c.h.b16 %v801
    %v1153 = vunpack.c.l.b16 %v802
    %v1154 = vunpack.c.h.b16 %v802
    %v1155 = vunpack.c.l.b16 %v803
    %v1156 = vunpack.c.h.b16 %v803
    %v1157 = vunpack.c.l.b16 %v804
    %v1158 = vunpack.c.h.b16 %v804
    %v1159 = vunpack.c.l.b16 %v805
    %v1160 = vunpack.c.h.b16 %v805
    %v1161 = vunpack.c.l.b16 %v806
    %v1162 = vunpack.c.h.b16 %v806
    %v1163 = vunpack.c.l.b16 %v807
    %v1164 = vunpack.c.h.b16 %v807
    %v1165 = vunpack.c.l.b16 %v808
    %v1166 = vunpack.c.h.b16 %v808
    %v1167 = vunpack.c.l.b16 %v809
    %v1168 = vunpack.c.h.b16 %v809
    %v1169 = vunpack.c.l.b16 %v810
    %v1170 = vunpack.c.h.b16 %v810
    %v1171 = vunpack.c.l.b16 %v811
    %v1172 = vunpack.c.h.b16 %v811
    %v1173 = vunpack.c.l.b16 %v812
    %v1174 = vunpack.c.h.b16 %v812
    %v1175 = vunpack.c.l.b16 %v813
    %v1176 = vunpack.c.h.b16 %v813
    %v1177 = vunpack.c.l.b16 %v814
    %v1178 = vunpack.c.h.b16 %v814
    %v1179 = vunpack.c.l.b16 %v815
    %v1180 = vunpack.c.h.b16 %v815
    %v1181 = vunpack.c.l.b16 %v816
    %v1182 = vunpack.c.h.b16 %v816
    %v1183 = vunpack.c.l.b16 %v817
    %v1184 = vunpack.c.h.b16 %v817
    %v1185 = vunpack.c.l.b16 %v818
    %v1186 = vunpack.c.h.b16 %v818
    %v1187 = vunpack.c.l.b16 %v819
    %v1188 = vunpack.c.h.b16 %v819
    %v1189 = vunpack.c.l.b16 %v820
    %v1190 = vunpack.c.h.b16 %v820
    %v1191 = vunpack.c.l.b16 %v821
    %v1192 = vunpack.c.h.b16 %v821
    %v1193 = vunpack.c.l.b16 %v822
    %v1194 = vunpack.c.h.b16 %v822
    %v1195 = vunpack.c.l.b16 %v823
    %v1196 = vunpack.c.h.b16 %v823
    %v1197 = vunpack.c.l.b16 %v824
    %v1198 = vunpack.c.h.b16 %v824
    %v1199 = vunpack.c.l.b16 %v825
    %v1200 = vunpack.c.h.b16 %v825
    %v1201 = vunpack.c.l.b16 %v826
    %v1202 = vunpack.c.h.b16 %v826
    %v1203 = vunpack.c.l.b16 %v827
    %v1204 = vunpack.c.h.b16 %v827
    %v1205 = vunpack.c.l.b16 %v828
    %v1206 = vunpack.c.h.b16 %v828
    %v1207 = vunpack.c.l.b16 %v829
    %v1208 = vunpack.c.h.b16 %v829
    %v1209 = vunpack.c.l.b16 %v830
    %v1210 = vunpack.c.h.b16 %v830
    %v1211 = vunpack.c.l.b16 %v831
    %v1212 = vunpack.c.h.b16 %v831
    %v1213 = vunpack.c.l.b16 %v832
    %v1214 = vunpack.c.h.b16 %v832
    %v1215 = vunpack.c.l.b16 %v833
    %v1216 = vunpack.c.h.b16 %v833
    %v1217 = vunpack.c.l.b16 %v834
    %v1218 = vunpack.c.h.b16 %v834
    %v1219 = vunpack.c.l.b16 %v835
    %v1220 = vunpack.c.h.b16 %v835
    %v1221 = vunpack.c.l.b16 %v836
    %v1222 = vunpack.c.h.b16 %v836
    %v1223 = vunpack.c.l.b16 %v837
    %v1224 = vunpack.c.h.b16 %v837
    %v1225 = vunpack.c.l.b16 %v838
    %v1226 = vunpack.c.h.b16 %v838
    %v1227 = vunpack.c.l.b16 %v839
    %v1228 = vunpack.c.h.b16 %v839
    %v1229 = vunpack.c.l.b16 %v840
    %v1230 = vunpack.c.h.b16 %v840
    %v1231 = vunpack.c.l.b16 %v841
    %v1232 = vunpack.c.h.b16 %v841
    %v1233 = vunpack.c.l.b16 %v842
    %v1234 = vunpack.c.h.b16 %v842
    %v1235 = vunpack.c.l.b16 %v843
    %v1236 = vunpack.c.h.b16 %v843
    %v1237 = vunpack.c.l.b16 %v844
    %v1238 = vunpack.c.h.b16 %v844
    %v1239 = vunpack.c.l.b16 %v845
    %v1240 = vunpack.c.h.b16 %v845
    %v1241 = vunpack.c.l.b16 %v846
    %v1242 = vunpack.c.h.b16 %v846
    %v1243 = vpack.c.b16 %v989, %v987
    %v1244 = vpack.c.b16 %v990, %v988
    %v1245 = vpack.c.b16 %v993, %v991
    %v1246 = vpack.c.b16 %v994, %v992
    %v1247 = vpack.c.b16 %v997, %v995
    %v1248 = vpack.c.b16 %v998, %v996
    %v1249 = vpack.c.b16 %v1001, %v999
    %v1250 = vpack.c.b16 %v1002, %v1000
    %v1251 = vpack.c.b16 %v1005, %v1003
    %v1252 = vpack.c.b16 %v1006, %v1004
    %v1253 = vpack.c.b16 %v1009, %v1007
    %v1254 = vpack.c.b16 %v1010, %v1008
    %v1255 = vpack.c.b16 %v1013, %v1011
    %v1256 = vpack.c.b16 %v1014, %v1012
    %v1257 = vpack.c.b16 %v1017, %v1015
    %v1258 = vpack.c.b16 %v1018, %v1016
    %v1259 = vpack.c.b16 %v1021, %v1019
    %v1260 = vpack.c.b16 %v1022, %v1020
    %v1261 = vpack.c.b16 %v1025, %v1023
    %v1262 = vpack.c.b16 %v1026, %v1024
    %v1263 = vpack.c.b16 %v1029, %v1027
    %v1264 = vpack.c.b16 %v1030, %v1028
    %v1265 = vpack.c.b16 %v1033, %v1031
    %v1266 = vpack.c.b16 %v1034, %v1032
    %v1267 = vpack.c.b16 %v1037, %v1035
    %v1268 = vpack.c.b16 %v1038, %v1036
    %v1269 = vpack.c.b16 %v1041, %v1039
    %v1270 = vpack.c.b16 %v1042, %v1040
    %v1271 = vpack.c.b16 %v1045, %v1043
    %v1272 = vpack.c.b16 %v1046, %v1044
    %v1273 = vpack.c.b16 %v1049, %v1047
    %v1274 = vpack.c.b16 %v1050, %v1048
    %v1275 = vpack.c.b16 %v1053, %v1051
    %v1276 = vpack.c.b16 %v1054, %v1052
    %v1277 = vpack.c.b16 %v1057, %v1055
    %v1278 = vpack.c.b16 %v1058, %v1056
    %v1279 = vpack.c.b16 %v1061, %v1059
    %v1280 = vpack.c.b16 %v1062, %v1060
    %v1281 = vpack.c.b16 %v1065, %v1063
    %v1282 = vpack.c.b16 %v1066, %v1064
    %v1283 = vpack.c.b16 %v1069, %v1067
    %v1284 = vpack.c.b16 %v1070, %v1068
    %v1285 = vpack.c.b16 %v1073, %v1071
    %v1286 = vpack.c.b16 %v1074, %v1072
    %v1287 = vpack.c.b16 %v1077, %v1075
    %v1288 = vpack.c.b16 %v1078, %v1076
    %v1289 = vpack.c.b16 %v1081, %v1079
    %v1290 = vpack.c.b16 %v1082, %v1080
    %v1291 = vpack.c.b16 %v1085, %v1083
    %v1292 = vpack.c.b16 %v1086, %v1084
    %v1293 = vpack.c.b16 %v1089, %v1087
    %v1294 = vpack.c.b16 %v1090, %v1088
    %v1295 = vpack.c.b16 %v1093, %v1091
    %v1296 = vpack.c.b16 %v1094, %v1092
    %v1297 = vpack.c.b16 %v1097, %v1095
    %v1298 = vpack.c.b16 %v1098, %v1096
    %v1299 = vpack.c.b16 %v1101, %v1099
    %v1300 = vpack.c.b16 %v1102, %v1100
    %v1301 = vpack.c.b16 %v1105, %v1103
    %v1302 = vpack.c.b16 %v1106, %v1104
    %v1303 = vpack.c.b16 %v1109, %v1107
    %v1304 = vpack.c.b16 %v1110, %v1108
    %v1305 = vpack.c.b16 %v1113, %v1111
    %v1306 = vpack.c.b16 %v1114, %v1112
    %v1307 = vpack.c.b16 %v1117, %v1115
    %v1308 = vpack.c.b16 %v1118, %v1116
    %v1309 = vpack.c.b16 %v1121, %v1119
    %v1310 = vpack.c.b16 %v1122, %v1120
    %v1311 = vpack.c.b16 %v1125, %v1123
    %v1312 = vpack.c.b16 %v1126, %v1124
    %v1313 = vpack.c.b16 %v1129, %v1127
    %v1314 = vpack.c.b16 %v1130, %v1128
    %v1315 = vpack.c.b16 %v1133, %v1131
    %v1316 = vpack.c.b16 %v1134, %v1132
    %v1317 = vpack.c.b16 %v1137, %v1135
    %v1318 = vpack.c.b16 %v1138, %v1136
    %v1319 = vpack.c.b16 %v1141, %v1139
    %v1320 = vpack.c.b16 %v1142, %v1140
    %v1321 = vpack.c.b16 %v1145, %v1143
    %v1322 = vpack.c.b16 %v1146, %v1144
    %v1323 = vpack.c.b16 %v1149, %v1147
    %v1324 = vpack.c.b16 %v1150, %v1148
    %v1325 = vpack.c.b16 %v1153, %v1151
    %v1326 = vpack.c.b16 %v1154, %v1152
    %v1327 = vpack.c.b16 %v1157, %v1155
    %v1328 = vpack.c.b16 %v1158, %v1156
    %v1329 = vpack.c.b16 %v1161, %v1159
    %v1330 = vpack.c.b16 %v1162, %v1160
    %v1331 = vpack.c.b16 %v1165, %v1163
    %v1332 = vpack.c.b16 %v1166, %v1164
    %v1333 = vpack.c.b16 %v1169, %v1167
    %v1334 = vpack.c.b16 %v1170, %v1168
    %v1335 = vpack.c.b16 %v1173, %v1171
    %v1336 = vpack.c.b16 %v1174, %v1172
    %v1337 = vpack.c.b16 %v1177, %v1175
    %v1338 = vpack.c.b16 %v1178, %v1176
    %v1339 = vpack.c.b16 %v1181, %v1179
    %v1340 = vpack.c.b16 %v1182, %v1180
    %v1341 = vpack.c.b16 %v1185, %v1183
    %v1342 = vpack.c.b16 %v1186, %v1184
    %v1343 = vpack.c.b16 %v1189, %v1187
    %v1344 = vpack.c.b16 %v1190, %v1188
    %v1345 = vpack.c.b16 %v1193, %v1191
    %v1346 = vpack.c.b16 %v1194, %v1192
    %v1347 = vpack.c.b16 %v1197, %v1195
    %v1348 = vpack.c.b16 %v1198, %v1196
    %v1349 = vpack.c.b16 %v1201, %v1199
    %v1350 = vpack.c.b16 %v1202, %v1200
    %v1351 = vpack.c.b16 %v1205, %v1203
    %v1352 = vpack.c.b16 %v1206, %v1204
    %v1353 = vpack.c.b16 %v1209, %v1207
    %v1354 = vpack.c.b16 %v1210, %v1208
    %v1355 = vpack.c.b16 %v1213, %v1211
    %v1356 = vpack.c.b16 %v1214, %v1212
    %v1357 = vpack.c.b16 %v1217, %v1215
    %v1358 = vpack.c.b16 %v1218, %v1216
    %v1359 = vpack.c.b16 %v1221, %v1219
    %v1360 = vpack.c.b16 %v1222, %v1220
    %v1361 = vpack.c.b16 %v1225, %v1223
    %v1362 = vpack.c.b16 %v1226, %v1224
    %v1363 = vpack.c.b16 %v1229, %v1227
    %v1364 = vpack.c.b16 %v1230, %v1228
    %v1365 = vpack.c.b16 %v1233, %v1231
    %v1366 = vpack.c.b16 %v1234, %v1232
    %v1367 = vpack.c.b16 %v1237, %v1235
    %v1368 = vpack.c.b16 %v1238, %v1236
    %v1369 = vpack.c.b16 %v1241, %v1239
    %v1370 = vpack.c.b16 %v1242, %v1240
    %1499 = vmatprep.subr.bf16.mxu0 %v1244
    %1500 = vmatpush1.bf16.msra.mxu0 %v1243
    %1501 = vmatprep.subr.bf16.mxu0 %v1246
    %1502 = vmatpush1.bf16.msra.mxu0 %v1245
    %1503 = vmatprep.subr.bf16.mxu0 %v1248
    %1504 = vmatpush1.bf16.msra.mxu0 %v1247
    %1505 = vmatprep.subr.bf16.mxu0 %v1250
    %1506 = vmatpush1.bf16.msra.mxu0 %v1249
    %1507 = vmatprep.subr.bf16.mxu0 %v1252
    %1508 = vmatpush1.bf16.msra.mxu0 %v1251
    %1509 = vmatprep.subr.bf16.mxu0 %v1254
    %1510 = vmatpush1.bf16.msra.mxu0 %v1253
    %1511 = vmatprep.subr.bf16.mxu0 %v1256
    %1512 = vmatpush1.bf16.msra.mxu0 %v1255
    %1513 = vmatprep.subr.bf16.mxu0 %v1258
    %1514 = vmatpush1.bf16.msra.mxu0 %v1257
    %1515 = vmatprep.subr.bf16.mxu0 %v1260
    %1516 = vmatpush1.bf16.msra.mxu0 %v1259
    %1517 = vmatprep.subr.bf16.mxu0 %v1262
    %1518 = vmatpush1.bf16.msra.mxu0 %v1261
    %1519 = vmatprep.subr.bf16.mxu0 %v1264
    %1520 = vmatpush1.bf16.msra.mxu0 %v1263
    %1521 = vmatprep.subr.bf16.mxu0 %v1266
    %1522 = vmatpush1.bf16.msra.mxu0 %v1265
    %1523 = vmatprep.subr.bf16.mxu0 %v1268
    %1524 = vmatpush1.bf16.msra.mxu0 %v1267
    %1525 = vmatprep.subr.bf16.mxu0 %v1270
    %1526 = vmatpush1.bf16.msra.mxu0 %v1269
    %1527 = vmatprep.subr.bf16.mxu0 %v1272
    %1528 = vmatpush1.bf16.msra.mxu0 %v1271
    %1529 = vmatprep.subr.bf16.mxu0 %v1274
    %1530 = vmatpush1.bf16.msra.mxu0 %v1273
    %1531 = vmatprep.mubr.bf16.mxu0 %v712
    %1532 = vmatmul.mubr.bf16.gmra.mrb[0].mxu0 %v711
    %v1533 = vpop.f32.mrb[0].mxu0
    %v1534 = vadd.f32 %v852, %v1533
    %v1535 = vpop.f32.mrb[0].mxu0
    %v1536 = vadd.f32 %v856, %v1535
    %v1537 = vpop.f32.mrb[0].mxu0
    %v1538 = vpop.f32.mrb[0].mxu0
    %1539 = vdwg.mxu0
    %1540 = vmatprep.subr.bf16.mxu0 %v1276
    %1541 = vmatpush1.bf16.msra.mxu0 %v1275
    %1542 = vmatprep.subr.bf16.mxu0 %v1278
    %1543 = vmatpush1.bf16.msra.mxu0 %v1277
    %1544 = vmatprep.subr.bf16.mxu0 %v1280
    %1545 = vmatpush1.bf16.msra.mxu0 %v1279
    %1546 = vmatprep.subr.bf16.mxu0 %v1282
    %1547 = vmatpush1.bf16.msra.mxu0 %v1281
    %1548 = vmatprep.subr.bf16.mxu0 %v1284
    %1549 = vmatpush1.bf16.msra.mxu0 %v1283
    %1550 = vmatprep.subr.bf16.mxu0 %v1286
    %1551 = vmatpush1.bf16.msra.mxu0 %v1285
    %1552 = vmatprep.subr.bf16.mxu0 %v1288
    %1553 = vmatpush1.bf16.msra.mxu0 %v1287
    %1554 = vmatprep.subr.bf16.mxu0 %v1290
    %1555 = vmatpush1.bf16.msra.mxu0 %v1289
    %1556 = vmatprep.subr.bf16.mxu0 %v1292
    %1557 = vmatpush1.bf16.msra.mxu0 %v1291
    %1558 = vmatprep.subr.bf16.mxu0 %v1294
    %1559 = vmatpush1.bf16.msra.mxu0 %v1293
    %1560 = vmatprep.subr.bf16.mxu0 %v1296
    %1561 = vmatpush1.bf16.msra.mxu0 %v1295
    %1562 = vmatprep.subr.bf16.mxu0 %v1298
    %1563 = vmatpush1.bf16.msra.mxu0 %v1297
    %1564 = vmatprep.subr.bf16.mxu0 %v1300
    %1565 = vmatpush1.bf16.msra.mxu0 %v1299
    %1566 = vmatprep.subr.bf16.mxu0 %v1302
    %1567 = vmatpush1.bf16.msra.mxu0 %v1301
    %1568 = vmatprep.subr.bf16.mxu0 %v1304
    %1569 = vmatpush1.bf16.msra.mxu0 %v1303
    %1570 = vmatprep.subr.bf16.mxu0 %v1306
    %1571 = vmatpush1.bf16.msra.mxu0 %v1305
    %1572 = vmatprep.mubr.bf16.mxu0 %v714
    %1573 = vmatmul.mubr.bf16.gmra.mrb[0].mxu0 %v713
    %v1574 = vpop.f32.mrb[0].mxu0
    %v1575 = vadd.f32 %v1534, %v1574
    %v1576 = vpop.f32.mrb[0].mxu0
    %v1577 = vadd.f32 %v1536, %v1576
    %v1578 = vpop.f32.mrb[0].mxu0
    %v1579 = vpop.f32.mrb[0].mxu0
    %1580 = vdwg.mxu0
    %1581 = vmatprep.subr.bf16.mxu0 %v1308
    %1582 = vmatpush1.bf16.msra.mxu0 %v1307
    %1583 = vmatprep.subr.bf16.mxu0 %v1310
    %1584 = vmatpush1.bf16.msra.mxu0 %v1309
    %1585 = vmatprep.subr.bf16.mxu0 %v1312
    %1586 = vmatpush1.bf16.msra.mxu0 %v1311
    %1587 = vmatprep.subr.bf16.mxu0 %v1314
    %1588 = vmatpush1.bf16.msra.mxu0 %v1313
    %1589 = vmatprep.subr.bf16.mxu0 %v1316
    %1590 = vmatpush1.bf16.msra.mxu0 %v1315
    %1591 = vmatprep.subr.bf16.mxu0 %v1318
    %1592 = vmatpush1.bf16.msra.mxu0 %v1317
    %1593 = vmatprep.subr.bf16.mxu0 %v1320
    %1594 = vmatpush1.bf16.msra.mxu0 %v1319
    %1595 = vmatprep.subr.bf16.mxu0 %v1322
    %1596 = vmatpush1.bf16.msra.mxu0 %v1321
    %1597 = vmatprep.subr.bf16.mxu0 %v1324
    %1598 = vmatpush1.bf16.msra.mxu0 %v1323
    %1599 = vmatprep.subr.bf16.mxu0 %v1326
    %1600 = vmatpush1.bf16.msra.mxu0 %v1325
    %1601 = vmatprep.subr.bf16.mxu0 %v1328
    %1602 = vmatpush1.bf16.msra.mxu0 %v1327
    %1603 = vmatprep.subr.bf16.mxu0 %v1330
    %1604 = vmatpush1.bf16.msra.mxu0 %v1329
    %1605 = vmatprep.subr.bf16.mxu0 %v1332
    %1606 = vmatpush1.bf16.msra.mxu0 %v1331
    %1607 = vmatprep.subr.bf16.mxu0 %v1334
    %1608 = vmatpush1.bf16.msra.mxu0 %v1333
    %1609 = vmatprep.subr.bf16.mxu0 %v1336
    %1610 = vmatpush1.bf16.msra.mxu0 %v1335
    %1611 = vmatprep.subr.bf16.mxu0 %v1338
    %1612 = vmatpush1.bf16.msra.mxu0 %v1337
    %1613 = vmatprep.mubr.bf16.mxu0 %v716
    %1614 = vmatmul.mubr.bf16.gmra.mrb[0].mxu0 %v715
    %v1615 = vpop.f32.mrb[0].mxu0
    %v1616 = vadd.f32 %v1575, %v1615
    %v1617 = vpop.f32.mrb[0].mxu0
    %v1618 = vadd.f32 %v1577, %v1617
    %v1619 = vpop.f32.mrb[0].mxu0
    %v1620 = vpop.f32.mrb[0].mxu0
    %1621 = vdwg.mxu0
    %1622 = vmatprep.subr.bf16.mxu0 %v1340
    %1623 = vmatpush1.bf16.msra.mxu0 %v1339
    %1624 = vmatprep.subr.bf16.mxu0 %v1342
    %1625 = vmatpush1.bf16.msra.mxu0 %v1341
    %1626 = vmatprep.subr.bf16.mxu0 %v1344
    %1627 = vmatpush1.bf16.msra.mxu0 %v1343
    %1628 = vmatprep.subr.bf16.mxu0 %v1346
    %1629 = vmatpush1.bf16.msra.mxu0 %v1345
    %1630 = vmatprep.subr.bf16.mxu0 %v1348
    %1631 = vmatpush1.bf16.msra.mxu0 %v1347
    %1632 = vmatprep.subr.bf16.mxu0 %v1350
    %1633 = vmatpush1.bf16.msra.mxu0 %v1349
    %1634 = vmatprep.subr.bf16.mxu0 %v1352
    %1635 = vmatpush1.bf16.msra.mxu0 %v1351
    %1636 = vmatprep.subr.bf16.mxu0 %v1354
    %1637 = vmatpush1.bf16.msra.mxu0 %v1353
    %1638 = vmatprep.subr.bf16.mxu0 %v1356
    %1639 = vmatpush1.bf16.msra.mxu0 %v1355
    %1640 = vmatprep.subr.bf16.mxu0 %v1358
    %1641 = vmatpush1.bf16.msra.mxu0 %v1357
    %1642 = vmatprep.subr.bf16.mxu0 %v1360
    %1643 = vmatpush1.bf16.msra.mxu0 %v1359
    %1644 = vmatprep.subr.bf16.mxu0 %v1362
    %1645 = vmatpush1.bf16.msra.mxu0 %v1361
    %1646 = vmatprep.subr.bf16.mxu0 %v1364
    %1647 = vmatpush1.bf16.msra.mxu0 %v1363
    %1648 = vmatprep.subr.bf16.mxu0 %v1366
    %1649 = vmatpush1.bf16.msra.mxu0 %v1365
    %1650 = vmatprep.subr.bf16.mxu0 %v1368
    %1651 = vmatpush1.bf16.msra.mxu0 %v1367
    %1652 = vmatprep.subr.bf16.mxu0 %v1370
    %1653 = vmatpush1.bf16.msra.mxu0 %v1369
    %1654 = vmatprep.mubr.bf16.mxu0 %v718
    %1655 = vmatmul.mubr.bf16.gmra.mrb[0].mxu0 %v717
    %v1656 = vpop.f32.mrb[0].mxu0
    %v1657 = vadd.f32 %v1616, %v1656
    %v1658 = vpop.f32.mrb[0].mxu0
    %v1659 = vadd.f32 %v1618, %v1658
    %v1660 = vpop.f32.mrb[0].mxu0
    %v1661 = vpop.f32.mrb[0].mxu0
    %1662 = vdwg.mxu0
    %v1663 = vmax.f32 %v1657, 0.0
    %v1664 = vmax.f32 %v1659, 0.0
    %v1665 = vpack.c.bf16 %v1663, %v1663
    %v1666 = vpack.c.bf16 %v1664, %v1664
    %v1667 = vld [vmem:[#allocation9] sm:$0xff]
    %v1668 = vld [vmem:[#allocation9 + $0x8] sm:$0xff]
    %v1669 = vld [vmem:[#allocation9 + $0x10] sm:$0xff]
    %v1670 = vld [vmem:[#allocation9 + $0x18] sm:$0xff]
    %v1671 = vld [vmem:[#allocation9 + $0x20] sm:$0xff]
    %v1672 = vld [vmem:[#allocation9 + $0x28] sm:$0xff]
    %v1673 = vld [vmem:[#allocation9 + $0x30] sm:$0xff]
    %v1674 = vld [vmem:[#allocation9 + $0x38] sm:$0xff]
    %v1675 = vld [vmem:[#allocation9 + $0x40] sm:$0xff]
    %v1676 = vld [vmem:[#allocation9 + $0x48] sm:$0xff]
    %v1677 = vld [vmem:[#allocation9 + $0x50] sm:$0xff]
    %v1678 = vld [vmem:[#allocation9 + $0x58] sm:$0xff]
    %v1679 = vld [vmem:[#allocation9 + $0x60] sm:$0xff]
    %v1680 = vld [vmem:[#allocation9 + $0x68] sm:$0xff]
    %v1681 = vld [vmem:[#allocation9 + $0x70] sm:$0xff]
    %v1682 = vld [vmem:[#allocation9 + $0x78] sm:$0xff]
    %v1683 = vld [vmem:[#allocation9 + $0x80] sm:$0xff]
    %v1684 = vld [vmem:[#allocation9 + $0x88] sm:$0xff]
    %v1685 = vld [vmem:[#allocation9 + $0x90] sm:$0xff]
    %v1686 = vld [vmem:[#allocation9 + $0x98] sm:$0xff]
    %v1687 = vld [vmem:[#allocation9 + $0xa0] sm:$0xff]
    %v1688 = vld [vmem:[#allocation9 + $0xa8] sm:$0xff]
    %v1689 = vld [vmem:[#allocation9 + $0xb0] sm:$0xff]
    %v1690 = vld [vmem:[#allocation9 + $0xb8] sm:$0xff]
    %v1691 = vld [vmem:[#allocation9 + $0xc0] sm:$0xff]
    %v1692 = vld [vmem:[#allocation9 + $0xc8] sm:$0xff]
    %v1693 = vld [vmem:[#allocation9 + $0xd0] sm:$0xff]
    %v1694 = vld [vmem:[#allocation9 + $0xd8] sm:$0xff]
    %v1695 = vld [vmem:[#allocation9 + $0xe0] sm:$0xff]
    %v1696 = vld [vmem:[#allocation9 + $0xe8] sm:$0xff]
    %v1697 = vld [vmem:[#allocation9 + $0xf0] sm:$0xff]
    %v1698 = vld [vmem:[#allocation9 + $0xf8] sm:$0xff]
    %v1699 = vld [vmem:[%s6] sm:$0x3]
    %v1701 = vlaneseq
    %v1702 = vshrl.u32 %v1701, 7
    %v1703 = vsub.s32 0, %v1702
    %v1704 = vrot.slane %v1699, %v1703
    %v1705 = vlaneseq
    %v1706 = vshrl.u32 %v1705, 7
    %v1707 = vsub.s32 1, %v1706
    %v1708 = vrot.slane %v1699, %v1707
    %v1743 = vunpack.c.l.b16 %v1667
    %v1744 = vunpack.c.h.b16 %v1667
    %v1745 = vunpack.c.l.b16 %v1668
    %v1746 = vunpack.c.h.b16 %v1668
    %v1747 = vunpack.c.l.b16 %v1669
    %v1748 = vunpack.c.h.b16 %v1669
    %v1749 = vunpack.c.l.b16 %v1670
    %v1750 = vunpack.c.h.b16 %v1670
    %v1751 = vunpack.c.l.b16 %v1671
    %v1752 = vunpack.c.h.b16 %v1671
    %v1753 = vunpack.c.l.b16 %v1672
    %v1754 = vunpack.c.h.b16 %v1672
    %v1755 = vunpack.c.l.b16 %v1673
    %v1756 = vunpack.c.h.b16 %v1673
    %v1757 = vunpack.c.l.b16 %v1674
    %v1758 = vunpack.c.h.b16 %v1674
    %v1759 = vunpack.c.l.b16 %v1675
    %v1760 = vunpack.c.h.b16 %v1675
    %v1761 = vunpack.c.l.b16 %v1676
    %v1762 = vunpack.c.h.b16 %v1676
    %v1763 = vunpack.c.l.b16 %v1677
    %v1764 = vunpack.c.h.b16 %v1677
    %v1765 = vunpack.c.l.b16 %v1678
    %v1766 = vunpack.c.h.b16 %v1678
    %v1767 = vunpack.c.l.b16 %v1679
    %v1768 = vunpack.c.h.b16 %v1679
    %v1769 = vunpack.c.l.b16 %v1680
    %v1770 = vunpack.c.h.b16 %v1680
    %v1771 = vunpack.c.l.b16 %v1681
    %v1772 = vunpack.c.h.b16 %v1681
    %v1773 = vunpack.c.l.b16 %v1682
    %v1774 = vunpack.c.h.b16 %v1682
    %v1775 = vunpack.c.l.b16 %v1683
    %v1776 = vunpack.c.h.b16 %v1683
    %v1777 = vunpack.c.l.b16 %v1684
    %v1778 = vunpack.c.h.b16 %v1684
    %v1779 = vunpack.c.l.b16 %v1685
    %v1780 = vunpack.c.h.b16 %v1685
    %v1781 = vunpack.c.l.b16 %v1686
    %v1782 = vunpack.c.h.b16 %v1686
    %v1783 = vunpack.c.l.b16 %v1687
    %v1784 = vunpack.c.h.b16 %v1687
    %v1785 = vunpack.c.l.b16 %v1688
    %v1786 = vunpack.c.h.b16 %v1688
    %v1787 = vunpack.c.l.b16 %v1689
    %v1788 = vunpack.c.h.b16 %v1689
    %v1789 = vunpack.c.l.b16 %v1690
    %v1790 = vunpack.c.h.b16 %v1690
    %v1791 = vunpack.c.l.b16 %v1691
    %v1792 = vunpack.c.h.b16 %v1691
    %v1793 = vunpack.c.l.b16 %v1692
    %v1794 = vunpack.c.h.b16 %v1692
    %v1795 = vunpack.c.l.b16 %v1693
    %v1796 = vunpack.c.h.b16 %v1693
    %v1797 = vunpack.c.l.b16 %v1694
    %v1798 = vunpack.c.h.b16 %v1694
    %v1799 = vunpack.c.l.b16 %v1695
    %v1800 = vunpack.c.h.b16 %v1695
    %v1801 = vunpack.c.l.b16 %v1696
    %v1802 = vunpack.c.h.b16 %v1696
    %v1803 = vunpack.c.l.b16 %v1697
    %v1804 = vunpack.c.h.b16 %v1697
    %v1805 = vunpack.c.l.b16 %v1698
    %v1806 = vunpack.c.h.b16 %v1698
    %v1807 = vpack.c.b16 %v1745, %v1743
    %v1808 = vpack.c.b16 %v1746, %v1744
    %v1809 = vpack.c.b16 %v1749, %v1747
    %v1810 = vpack.c.b16 %v1750, %v1748
    %v1811 = vpack.c.b16 %v1753, %v1751
    %v1812 = vpack.c.b16 %v1754, %v1752
    %v1813 = vpack.c.b16 %v1757, %v1755
    %v1814 = vpack.c.b16 %v1758, %v1756
    %v1815 = vpack.c.b16 %v1761, %v1759
    %v1816 = vpack.c.b16 %v1762, %v1760
    %v1817 = vpack.c.b16 %v1765, %v1763
    %v1818 = vpack.c.b16 %v1766, %v1764
    %v1819 = vpack.c.b16 %v1769, %v1767
    %v1820 = vpack.c.b16 %v1770, %v1768
    %v1821 = vpack.c.b16 %v1773, %v1771
    %v1822 = vpack.c.b16 %v1774, %v1772
    %v1823 = vpack.c.b16 %v1777, %v1775
    %v1824 = vpack.c.b16 %v1778, %v1776
    %v1825 = vpack.c.b16 %v1781, %v1779
    %v1826 = vpack.c.b16 %v1782, %v1780
    %v1827 = vpack.c.b16 %v1785, %v1783
    %v1828 = vpack.c.b16 %v1786, %v1784
    %v1829 = vpack.c.b16 %v1789, %v1787
    %v1830 = vpack.c.b16 %v1790, %v1788
    %v1831 = vpack.c.b16 %v1793, %v1791
    %v1832 = vpack.c.b16 %v1794, %v1792
    %v1833 = vpack.c.b16 %v1797, %v1795
    %v1834 = vpack.c.b16 %v1798, %v1796
    %v1835 = vpack.c.b16 %v1801, %v1799
    %v1836 = vpack.c.b16 %v1802, %v1800
    %v1837 = vpack.c.b16 %v1805, %v1803
    %v1838 = vpack.c.b16 %v1806, %v1804
    %1871 = vmatprep.subr.bf16.mxu0 %v1808
    %1872 = vmatpush1.bf16.msra.mxu0 %v1807
    %1873 = vmatprep.subr.bf16.mxu0 %v1810
    %1874 = vmatpush1.bf16.msra.mxu0 %v1809
    %1875 = vmatprep.subr.bf16.mxu0 %v1812
    %1876 = vmatpush1.bf16.msra.mxu0 %v1811
    %1877 = vmatprep.subr.bf16.mxu0 %v1814
    %1878 = vmatpush1.bf16.msra.mxu0 %v1813
    %1879 = vmatprep.subr.bf16.mxu0 %v1816
    %1880 = vmatpush1.bf16.msra.mxu0 %v1815
    %1881 = vmatprep.subr.bf16.mxu0 %v1818
    %1882 = vmatpush1.bf16.msra.mxu0 %v1817
    %1883 = vmatprep.subr.bf16.mxu0 %v1820
    %1884 = vmatpush1.bf16.msra.mxu0 %v1819
    %1885 = vmatprep.subr.bf16.mxu0 %v1822
    %1886 = vmatpush1.bf16.msra.mxu0 %v1821
    %1887 = vmatprep.subr.bf16.mxu0 %v1824
    %1888 = vmatpush1.bf16.msra.mxu0 %v1823
    %1889 = vmatprep.subr.bf16.mxu0 %v1826
    %1890 = vmatpush1.bf16.msra.mxu0 %v1825
    %1891 = vmatprep.subr.bf16.mxu0 %v1828
    %1892 = vmatpush1.bf16.msra.mxu0 %v1827
    %1893 = vmatprep.subr.bf16.mxu0 %v1830
    %1894 = vmatpush1.bf16.msra.mxu0 %v1829
    %1895 = vmatprep.subr.bf16.mxu0 %v1832
    %1896 = vmatpush1.bf16.msra.mxu0 %v1831
    %1897 = vmatprep.subr.bf16.mxu0 %v1834
    %1898 = vmatpush1.bf16.msra.mxu0 %v1833
    %1899 = vmatprep.subr.bf16.mxu0 %v1836
    %1900 = vmatpush1.bf16.msra.mxu0 %v1835
    %1901 = vmatprep.subr.bf16.mxu0 %v1838
    %1902 = vmatpush1.bf16.msra.mxu0 %v1837
    %1903 = vmatprep.mubr.bf16.mxu0 %v1666
    %1904 = vmatmul.mubr.bf16.gmra.mrb[0].mxu0 %v1665
    %v1905 = vpop.f32.mrb[0].mxu0
    %v1906 = vadd.f32 %v1704, %v1905
    %v1907 = vpop.f32.mrb[0].mxu0
    %v1908 = vadd.f32 %v1708, %v1907
    %v1909 = vpop.f32.mrb[0].mxu0
    %v1910 = vpop.f32.mrb[0].mxu0
    %1911 = vdwg.mxu0
    %v1912 = vmax.f32 %v1906, 0.0
    %v1913 = vmax.f32 %v1908, 0.0
    %v1914 = vpack.c.bf16 %v1912, %v1912
    %v1915 = vpack.c.bf16 %v1913, %v1913
    %v1916 = vld [vmem:[#allocation10] sm:$0xf]
    %v1917 = vld [vmem:[#allocation10 + $0x4] sm:$0xf]
    %v1918 = vld [vmem:[#allocation10 + $0x8] sm:$0xf]
    %v1919 = vld [vmem:[#allocation10 + $0xc] sm:$0xf]
    %v1920 = vld [vmem:[#allocation10 + $0x10] sm:$0xf]
    %v1921 = vld [vmem:[#allocation10 + $0x14] sm:$0xf]
    %v1922 = vld [vmem:[#allocation10 + $0x18] sm:$0xf]
    %v1923 = vld [vmem:[#allocation10 + $0x1c] sm:$0xf]
    %v1924 = vld [vmem:[#allocation10 + $0x20] sm:$0xf]
    %v1925 = vld [vmem:[#allocation10 + $0x24] sm:$0xf]
    %v1926 = vld [vmem:[#allocation10 + $0x28] sm:$0xf]
    %v1927 = vld [vmem:[#allocation10 + $0x2c] sm:$0xf]
    %v1928 = vld [vmem:[#allocation10 + $0x30] sm:$0xf]
    %v1929 = vld [vmem:[#allocation10 + $0x34] sm:$0xf]
    %v1930 = vld [vmem:[#allocation10 + $0x38] sm:$0xf]
    %v1931 = vld [vmem:[#allocation10 + $0x3c] sm:$0xf]
    %v1932 = vld [vmem:[#allocation10 + $0x40] sm:$0xf]
    %v1933 = vld [vmem:[#allocation10 + $0x44] sm:$0xf]
    %v1934 = vld [vmem:[#allocation10 + $0x48] sm:$0xf]
    %v1935 = vld [vmem:[#allocation10 + $0x4c] sm:$0xf]
    %v1936 = vld [vmem:[#allocation10 + $0x50] sm:$0xf]
    %v1937 = vld [vmem:[#allocation10 + $0x54] sm:$0xf]
    %v1938 = vld [vmem:[#allocation10 + $0x58] sm:$0xf]
    %v1939 = vld [vmem:[#allocation10 + $0x5c] sm:$0xf]
    %v1940 = vld [vmem:[#allocation10 + $0x60] sm:$0xf]
    %v1941 = vld [vmem:[#allocation10 + $0x64] sm:$0xf]
    %v1942 = vld [vmem:[#allocation10 + $0x68] sm:$0xf]
    %v1943 = vld [vmem:[#allocation10 + $0x6c] sm:$0xf]
    %v1944 = vld [vmem:[#allocation10 + $0x70] sm:$0xf]
    %v1945 = vld [vmem:[#allocation10 + $0x74] sm:$0xf]
    %v1946 = vld [vmem:[#allocation10 + $0x78] sm:$0xf]
    %v1947 = vld [vmem:[#allocation10 + $0x7c] sm:$0xf]
    %v1948 = vld [vmem:[%s8] sm:$0x1]
    %v1950 = vlaneseq
    %v1951 = vshrl.u32 %v1950, 7
    %v1952 = vsub.s32 0, %v1951
    %v1953 = vrot.slane %v1948, %v1952
    %v1987 = vunpack.c.l.b16 %v1916
    %v1988 = vunpack.c.l.b16 %v1917
    %v1989 = vunpack.c.l.b16 %v1918
    %v1990 = vunpack.c.l.b16 %v1919
    %v1991 = vunpack.c.l.b16 %v1920
    %v1992 = vunpack.c.l.b16 %v1921
    %v1993 = vunpack.c.l.b16 %v1922
    %v1994 = vunpack.c.l.b16 %v1923
    %v1995 = vunpack.c.l.b16 %v1924
    %v1996 = vunpack.c.l.b16 %v1925
    %v1997 = vunpack.c.l.b16 %v1926
    %v1998 = vunpack.c.l.b16 %v1927
    %v1999 = vunpack.c.l.b16 %v1928
    %v2000 = vunpack.c.l.b16 %v1929
    %v2001 = vunpack.c.l.b16 %v1930
    %v2002 = vunpack.c.l.b16 %v1931
    %v2003 = vunpack.c.l.b16 %v1932
    %v2004 = vunpack.c.l.b16 %v1933
    %v2005 = vunpack.c.l.b16 %v1934
    %v2006 = vunpack.c.l.b16 %v1935
    %v2007 = vunpack.c.l.b16 %v1936
    %v2008 = vunpack.c.l.b16 %v1937
    %v2009 = vunpack.c.l.b16 %v1938
    %v2010 = vunpack.c.l.b16 %v1939
    %v2011 = vunpack.c.l.b16 %v1940
    %v2012 = vunpack.c.l.b16 %v1941
    %v2013 = vunpack.c.l.b16 %v1942
    %v2014 = vunpack.c.l.b16 %v1943
    %v2015 = vunpack.c.l.b16 %v1944
    %v2016 = vunpack.c.l.b16 %v1945
    %v2017 = vunpack.c.l.b16 %v1946
    %v2018 = vunpack.c.l.b16 %v1947
    %v2019 = vpack.c.b16 %v1988, %v1987
    %v2020 = vpack.c.b16 %v1990, %v1989
    %v2021 = vpack.c.b16 %v1992, %v1991
    %v2022 = vpack.c.b16 %v1994, %v1993
    %v2023 = vpack.c.b16 %v1996, %v1995
    %v2024 = vpack.c.b16 %v1998, %v1997
    %v2025 = vpack.c.b16 %v2000, %v1999
    %v2026 = vpack.c.b16 %v2002, %v2001
    %v2027 = vpack.c.b16 %v2004, %v2003
    %v2028 = vpack.c.b16 %v2006, %v2005
    %v2029 = vpack.c.b16 %v2008, %v2007
    %v2030 = vpack.c.b16 %v2010, %v2009
    %v2031 = vpack.c.b16 %v2012, %v2011
    %v2032 = vpack.c.b16 %v2014, %v2013
    %v2033 = vpack.c.b16 %v2016, %v2015
    %v2034 = vpack.c.b16 %v2018, %v2017
    %2051 = vmatprep.subr.bf16.mxu0 0
    %2052 = vmatpush1.bf16.msra.mxu0 %v2019
    %2053 = vmatprep.subr.bf16.mxu0 0
    %2054 = vmatpush1.bf16.msra.mxu0 %v2020
    %2055 = vmatprep.subr.bf16.mxu0 0
    %2056 = vmatpush1.bf16.msra.mxu0 %v2021
    %2057 = vmatprep.subr.bf16.mxu0 0
    %2058 = vmatpush1.bf16.msra.mxu0 %v2022
    %2059 = vmatprep.subr.bf16.mxu0 0
    %2060 = vmatpush1.bf16.msra.mxu0 %v2023
    %2061 = vmatprep.subr.bf16.mxu0 0
    %2062 = vmatpush1.bf16.msra.mxu0 %v2024
    %2063 = vmatprep.subr.bf16.mxu0 0
    %2064 = vmatpush1.bf16.msra.mxu0 %v2025
    %2065 = vmatprep.subr.bf16.mxu0 0
    %2066 = vmatpush1.bf16.msra.mxu0 %v2026
    %2067 = vmatprep.subr.bf16.mxu0 0
    %2068 = vmatpush1.bf16.msra.mxu0 %v2027
    %2069 = vmatprep.subr.bf16.mxu0 0
    %2070 = vmatpush1.bf16.msra.mxu0 %v2028
    %2071 = vmatprep.subr.bf16.mxu0 0
    %2072 = vmatpush1.bf16.msra.mxu0 %v2029
    %2073 = vmatprep.subr.bf16.mxu0 0
    %2074 = vmatpush1.bf16.msra.mxu0 %v2030
    %2075 = vmatprep.subr.bf16.mxu0 0
    %2076 = vmatpush1.bf16.msra.mxu0 %v2031
    %2077 = vmatprep.subr.bf16.mxu0 0
    %2078 = vmatpush1.bf16.msra.mxu0 %v2032
    %2079 = vmatprep.subr.bf16.mxu0 0
    %2080 = vmatpush1.bf16.msra.mxu0 %v2033
    %2081 = vmatprep.subr.bf16.mxu0 0
    %2082 = vmatpush1.bf16.msra.mxu0 %v2034
    %2083 = vmatprep.mubr.bf16.mxu0 %v1915
    %2084 = vmatmul.mubr.bf16.gmra.mrb[0].mxu0 %v1914
    %v2085 = vpop.f32.mrb[0].mxu0
    %v2086 = vadd.f32 %v1953, %v2085
    %v2087 = vpop.f32.mrb[0].mxu0
    %v2088 = vpop.f32.mrb[0].mxu0
    %v2089 = vpop.f32.mrb[0].mxu0
    %2090 = vdwg.mxu0
    %2091 = vst [vmem:[%s9] sm:$0xff] %v2086
    // Predicated region
    $region62: #{net_forward.1} parent=1 // pred_check
      _
    $region63: #{net_forward.1} parent=1 // pred_check_branch
      %2093 = sbr.rel (0) target = $region65
    $region64: #{net_forward.1} parent=1 // pred_region
      _
    $region65: #{net_forward.1} parent=1 // pred_fallthru
      _
    // Predicated region
    $region66: #{net_forward.1} parent=1 // pred_check
      _
    $region67: #{net_forward.1} parent=1 // pred_check_branch
      %2095 = sbr.rel (0) target = $region69
    $region68: #{net_forward.1} parent=1 // pred_region
      _
    $region69: #{net_forward.1} parent=1 // pred_fallthru
      _
    %2096 = vsyncpa [#allocation3], 1
    %2097 = vsyncpa [#allocation5], 1
    %2098 = vsyncpa [#allocation8], 1
    %2099 = vsyncpa [#allocation11], 1

</llo_original>
